<compile_context>
chip_gen: v7x
topology: tpu7x:2x2x1
jax: 0.10.0
libtpu: 0.0.40
codegen_flags: <defaults>
</compile_context>

<pallas_src>
import functools

import jax
import jax.numpy as jnp
from jax.experimental import pallas as pl
from jax.experimental.pallas import tpu as pltpu


def _round_up(x, m):
    return (x + m - 1) // m * m


# ---------------------------------------------------------------------------
# Fused Pallas kernel (variant chosen in Python at trace time)
# ---------------------------------------------------------------------------
def _make_fused_kernel(H1, W1, Ci, Po, stride_one, has_proj):
    """conv1(3x3)+bn1+relu -> conv2(3x3)+bn2 -> (+shortcut) -> relu.

    One batch element per grid step; the intermediate activation stays in a
    VMEM scratch tile (never written to HBM).
    """
    M = H1 * W1

    def kernel(*refs):
        c1_ref, w1_ref, s1_ref, b1_ref, w2_ref, s2_ref, b2_ref = refs[:7]
        pos = 7
        if not stride_one:
            sx_ref = refs[pos]
            pos += 1
        if has_proj:
            ws_ref, ss_ref, bs_ref = refs[pos:pos + 3]
            pos += 3
        o_ref = refs[pos]
        y1p_ref = refs[pos + 1]

        # ---- conv1 + bn1 + relu -------------------------------------------
        if stride_one:
            # c1_ref: (1, H+2, W+2, Ci) f32 padded input.  Single bf16 cast,
            # then form the 9 shifted patch views from the in-VMEM value
            # (no im2col array in HBM).
            xb = c1_ref[0].astype(jnp.bfloat16)
            acc1 = None
            for t in range(9):
                kh, kw = divmod(t, 3)
                a = xb[kh:kh + H1, kw:kw + W1, :].reshape(M, Ci)
                d = jnp.dot(a, w1_ref[t], preferred_element_type=jnp.float32)
                acc1 = d if acc1 is None else acc1 + d
        else:
            # c1_ref: (1, M, Kc) bf16 im2col patches (strided conv1 only).
            acc1 = jnp.dot(c1_ref[0], w1_ref[...],
                           preferred_element_type=jnp.float32)
        y1 = jnp.maximum(acc1 * s1_ref[...] + b1_ref[...], 0.0)

        # Keep y1 on-chip: zero-haloed VMEM scratch feeds conv2's patches.
        # Re-zeroed every grid step so "parallel" grid sharding stays safe.
        y1p_ref[...] = jnp.zeros(y1p_ref.shape, y1p_ref.dtype)
        y1p_ref[1:H1 + 1, 1:W1 + 1, :] = y1.reshape(H1, W1, Po)

        # ---- conv2 + bn2 ---------------------------------------------------
        y1b = y1p_ref[...].astype(jnp.bfloat16)          # single cast
        acc2 = None
        for t in range(9):
            kh, kw = divmod(t, 3)
            a = y1b[kh:kh + H1, kw:kw + W1, :].reshape(M, Po)
            d = jnp.dot(a, w2_ref[t], preferred_element_type=jnp.float32)
            acc2 = d if acc2 is None else acc2 + d
        out = acc2 * s2_ref[...] + b2_ref[...]

        # ---- shortcut + add + relu ------------------------------------------
        if has_proj:
            if stride_one:
                sc_in = xb[1:H1 + 1, 1:W1 + 1, :].reshape(M, Ci)   # bf16
            else:
                sc_in = sx_ref[0]                                   # (M, Ci) bf16
            sc = jnp.dot(sc_in, ws_ref[...], preferred_element_type=jnp.float32)
            sc = sc * ss_ref[...] + bs_ref[...]
        else:
            # identity shortcut: exact f32 add of the resident input tile
            # (Ci == Po in this case).
            sc = c1_ref[0, 1:H1 + 1, 1:W1 + 1, :].reshape(M, Po)
        o_ref[0] = jnp.maximum(out + sc, 0.0).astype(o_ref.dtype)

    return kernel


# ---------------------------------------------------------------------------
# Glue (plain JAX): weight / BN reshaping, padding, im2col for strided conv1
# ---------------------------------------------------------------------------
def _fold_bn(bn, P, Po, eps=1e-5):
    gamma, beta, mean, var = bn
    scale = gamma.astype(jnp.float32) / jnp.sqrt(var.astype(jnp.float32) + eps)
    shift = beta.astype(jnp.float32) - mean.astype(jnp.float32) * scale
    scale = jnp.pad(scale, (0, Po - P), constant_values=1.0)
    shift = jnp.pad(shift, (0, Po - P))
    return scale[None, :], shift[None, :]             # (1, Po) f32 each


def _conv_taps(w_oihw, Ci, Po):
    # (Cout, Cin, kh, kw) -> (kh*kw, Ci, Po), zero-padded, bf16 (tap-major).
    Cout, Cin, kh, kw = w_oihw.shape
    w = jnp.transpose(w_oihw, (2, 3, 1, 0)).reshape(kh * kw, Cin, Cout)
    w = jnp.pad(w, ((0, 0), (0, Ci - Cin), (0, Po - Cout)))
    return w.astype(jnp.bfloat16)


def _im2col_3x3(xp, stride, H1, W1):
    # xp: (N, Hp, Wp, C) already spatially zero-padded; returns (N, H1*W1, 9*C).
    N = xp.shape[0]
    C = xp.shape[-1]
    cols = []
    for kh in range(3):
        for kw in range(3):
            sl = xp[:, kh:kh + (H1 - 1) * stride + 1:stride,
                       kw:kw + (W1 - 1) * stride + 1:stride, :]
            cols.append(sl.reshape(N, H1 * W1, C))
    return jnp.concatenate(cols, axis=-1)


def basic_block_forward(x_nchw, params, stride):
    x = jnp.transpose(x_nchw, (0, 2, 3, 1)).astype(jnp.float32)   # NHWC
    N, H, W, Cin = x.shape
    P = params["w1"].shape[0]
    Ci = _round_up(Cin, 128)          # lane-padded input channels
    Po = _round_up(P, 128)            # lane-padded output channels
    H1 = (H + 2 - 3) // stride + 1
    W1 = (W + 2 - 3) // stride + 1
    M = H1 * W1

    stride_one = (stride == 1)
    has_proj = params.get("ws") is not None

    w2_t = _conv_taps(params["w2"], Po, Po)            # (9, Po, Po) bf16
    s1, b1 = _fold_bn(params["bn1"], P, Po)
    s2, b2 = _fold_bn(params["bn2"], P, Po)

    inputs, in_specs = [], []

    if stride_one:
        # spatial halo for conv1 + channel pad to Ci (zeros); f32 so the
        # identity shortcut adds the exact input.  bf16-cast in-kernel.
        xp = jnp.pad(x, ((0, 0), (1, 1), (1, 1), (0, Ci - Cin)))
        inputs.append(xp)
        in_specs.append(pl.BlockSpec((1, H + 2, W + 2, Ci),
                                     lambda n: (n, 0, 0, 0)))
        w1_t = _conv_taps(params["w1"], Ci, Po)        # (9, Ci, Po) bf16
        inputs.append(w1_t)
        in_specs.append(pl.BlockSpec((9, Ci, Po), lambda n: (0, 0, 0)))
    else:
        # strided conv1: glue-side im2col (conv1 only; conv2 stays in-VMEM).
        # Pack K to round_up(9*Cin, 128) -- much smaller than padding each
        # tap's channels to 128 before concatenating.
        Kc = _round_up(9 * Cin, 128)
        xp_s = jnp.pad(x, ((0, 0), (1, 1), (1, 1), (0, 0)))
        p1 = _im2col_3x3(xp_s, stride, H1, W1)                   # (N, M, 9*Cin)
        p1 = jnp.pad(p1, ((0, 0), (0, 0), (0, Kc - 9 * Cin))).astype(jnp.bfloat16)
        inputs.append(p1)                                         # (N, M, Kc)
        in_specs.append(pl.BlockSpec((1, M, Kc), lambda n: (n, 0, 0)))
        w1f = jnp.transpose(params["w1"], (2, 3, 1, 0)).reshape(9 * Cin, P)
        w1f = jnp.pad(w1f, ((0, Kc - 9 * Cin), (0, Po - P))).astype(jnp.bfloat16)
        inputs.append(w1f)                                        # (Kc, Po)
        in_specs.append(pl.BlockSpec((Kc, Po), lambda n: (0, 0)))

    inputs += [s1, b1, w2_t, s2, b2]
    in_specs += [
        pl.BlockSpec((1, Po), lambda n: (0, 0)),
        pl.BlockSpec((1, Po), lambda n: (0, 0)),
        pl.BlockSpec((9, Po, Po), lambda n: (0, 0, 0)),
        pl.BlockSpec((1, Po), lambda n: (0, 0)),
        pl.BlockSpec((1, Po), lambda n: (0, 0)),
    ]

    if not stride_one:
        # strided 1x1-conv shortcut input (projection always exists here)
        sx = x[:, ::stride, ::stride, :]
        sx = jnp.pad(sx, ((0, 0), (0, 0), (0, 0), (0, Ci - Cin)))
        sx = sx.reshape(N, M, Ci).astype(jnp.bfloat16)
        inputs.append(sx)
        in_specs.append(pl.BlockSpec((1, M, Ci), lambda n: (n, 0, 0)))

    if has_proj:
        ws = _conv_taps(params["ws"], Ci, Po)[0]       # (Ci, Po) bf16
        ss, bs = _fold_bn(params["bns"], P, Po)
        inputs += [ws, ss, bs]
        in_specs += [
            pl.BlockSpec((Ci, Po), lambda n: (0, 0)),
            pl.BlockSpec((1, Po), lambda n: (0, 0)),
            pl.BlockSpec((1, Po), lambda n: (0, 0)),
        ]

    kernel = _make_fused_kernel(H1, W1, Ci, Po, stride_one, has_proj)

    out_flat = pl.pallas_call(
        kernel,
        out_shape=jax.ShapeDtypeStruct((N, M, Po), jnp.float32),
        grid=(N,),
        in_specs=in_specs,
        out_specs=pl.BlockSpec((1, M, Po), lambda n: (n, 0, 0)),
        scratch_shapes=[pltpu.VMEM((H1 + 2, W1 + 2, Po), jnp.float32)],
        compiler_params=pltpu.CompilerParams(
            dimension_semantics=("parallel",),
            vmem_limit_bytes=32 * 1024 * 1024),
    )(*inputs)

    out = out_flat.reshape(N, H1, W1, Po)[..., :P]
    return jnp.transpose(out, (0, 3, 1, 2))            # -> NCHW


# ---------------------------------------------------------------------------
# Pure-JAX reference mirroring the kernel numerics (bf16 matmul operands,
# f32 accumulation / BN / epilogue) — for correctness check only.
# ---------------------------------------------------------------------------
def _ref_forward(x, params, stride):
    def conv(a, w, s, pad):
        return jax.lax.conv_general_dilated(
            a.astype(jnp.bfloat16), w.astype(jnp.bfloat16), (s, s), pad,
            dimension_numbers=("NCHW", "OIHW", "NCHW"),
            preferred_element_type=jnp.float32)

    def bn(y, p, eps=1e-5):
        g, b, m, v = p
        scale = g / jnp.sqrt(v + eps)
        shift = b - m * scale
        return y * scale[None, :, None, None] + shift[None, :, None, None]

    y1 = jax.nn.relu(bn(conv(x, params["w1"], stride, ((1, 1), (1, 1))),
                        params["bn1"]))
    out = bn(conv(y1, params["w2"], 1, ((1, 1), (1, 1))), params["bn2"])
    if params.get("ws") is not None:
        sc = bn(conv(x, params["ws"], stride, ((0, 0), (0, 0))), params["bns"])
    else:
        sc = x
    return jax.nn.relu(out + sc)


# ---------------------------------------------------------------------------
if __name__ == "__main__":
    key = jax.random.PRNGKey(0)

    def bn_params(k, c):
        k0, k1, k2, k3 = jax.random.split(k, 4)
        return (jax.random.uniform(k0, (c,), minval=0.8, maxval=1.2),
                jax.random.normal(k1, (c,)) * 0.1,
                jax.random.normal(k2, (c,)) * 0.1,
                jax.random.uniform(k3, (c,), minval=0.5, maxval=1.5))

    def make_params(k, in_planes, planes, stride):
        ks = jax.random.split(k, 6)
        needs_proj = (stride != 1) or (in_planes != planes)
        return {
            "w1": jax.random.normal(ks[0], (planes, in_planes, 3, 3),
                                    jnp.float32) * 0.1,
            "bn1": bn_params(ks[1], planes),
            "w2": jax.random.normal(ks[2], (planes, planes, 3, 3),
                                    jnp.float32) * 0.1,
            "bn2": bn_params(ks[3], planes),
            "ws": (jax.random.normal(ks[4], (planes, in_planes, 1, 1),
                                     jnp.float32) * 0.1
                   if needs_proj else None),
            "bns": (bn_params(ks[5], planes) if needs_proj else None),
        }

    configs = [
        # (N, in_planes, planes, H, W, stride)
        (2, 4, 8, 16, 16, 2),   # strided block -> projection shortcut (im2col path)
        (2, 8, 8, 16, 16, 1),   # identity shortcut (in-kernel patch path)
        (2, 4, 8, 16, 16, 1),   # stride-1 block with projection shortcut
    ]
    for idx, (N, cin, cout, H, W, stride) in enumerate(configs):
        kx, kp = jax.random.split(jax.random.fold_in(key, idx))
        x = jax.random.normal(kx, (N, cin, H, W), jnp.float32)
        params = make_params(kp, cin, cout, stride)

        fwd = jax.jit(functools.partial(basic_block_forward, stride=stride))
        out = fwd(x, params)
        jax.block_until_ready(out)

        ref = _ref_forward(x, params, stride)
        assert out.shape == ref.shape, (out.shape, ref.shape)
        err = float(jnp.max(jnp.abs(out - ref)))
        assert jnp.allclose(out, ref, atol=1e-2, rtol=1e-2), (idx, err)

    print("KERNEL_OK")
</pallas_src>

<mosaic_0001>
module attributes {stable_mosaic.version = 11 : i64} {
  func.func @kernel(%arg0: i32, %arg1: memref<1x64x128xbf16, #tpu.memory_space<vmem>>, %arg2: memref<128x128xbf16, #tpu.memory_space<vmem>>, %arg3: memref<1x128xf32, #tpu.memory_space<vmem>>, %arg4: memref<1x128xf32, #tpu.memory_space<vmem>>, %arg5: memref<9x128x128xbf16, #tpu.memory_space<vmem>>, %arg6: memref<1x128xf32, #tpu.memory_space<vmem>>, %arg7: memref<1x128xf32, #tpu.memory_space<vmem>>, %arg8: memref<1x64x128xbf16, #tpu.memory_space<vmem>>, %arg9: memref<128x128xbf16, #tpu.memory_space<vmem>>, %arg10: memref<1x128xf32, #tpu.memory_space<vmem>>, %arg11: memref<1x128xf32, #tpu.memory_space<vmem>>, %arg12: memref<1x64x128xf32, #tpu.memory_space<vmem>>, %arg13: memref<10x10x128xf32, #tpu.memory_space<vmem>>) attributes {dimension_semantics = [#tpu.dimension_semantics<parallel>], iteration_bounds = array<i64: 2>, scalar_prefetch = 0 : i64, scratch_operands = 1 : i64, tpu.core_type = #tpu.core_type<tc>, window_params = [{transform_indices = @transform_0, window_bounds = array<i64: 1, 64, 128>}, {pipeline_mode = #tpu.pipeline_mode<synchronous>, transform_indices = @transform_1, window_bounds = array<i64: 128, 128>}, {pipeline_mode = #tpu.pipeline_mode<synchronous>, transform_indices = @transform_2, window_bounds = array<i64: 1, 128>}, {pipeline_mode = #tpu.pipeline_mode<synchronous>, transform_indices = @transform_3, window_bounds = array<i64: 1, 128>}, {pipeline_mode = #tpu.pipeline_mode<synchronous>, transform_indices = @transform_4, window_bounds = array<i64: 9, 128, 128>}, {pipeline_mode = #tpu.pipeline_mode<synchronous>, transform_indices = @transform_5, window_bounds = array<i64: 1, 128>}, {pipeline_mode = #tpu.pipeline_mode<synchronous>, transform_indices = @transform_6, window_bounds = array<i64: 1, 128>}, {transform_indices = @transform_7, window_bounds = array<i64: 1, 64, 128>}, {pipeline_mode = #tpu.pipeline_mode<synchronous>, transform_indices = @transform_8, window_bounds = array<i64: 128, 128>}, {pipeline_mode = #tpu.pipeline_mode<synchronous>, transform_indices = @transform_9, window_bounds = array<i64: 1, 128>}, {pipeline_mode = #tpu.pipeline_mode<synchronous>, transform_indices = @transform_10, window_bounds = array<i64: 1, 128>}, {transform_indices = @transform_11, window_bounds = array<i64: 1, 64, 128>}]} {
    %c0 = arith.constant 0 : index
    %c0_0 = arith.constant 0 : index
    %c0_1 = arith.constant 0 : index
    %0 = vector.load %arg1[%c0, %c0_0, %c0_1] : memref<1x64x128xbf16, #tpu.memory_space<vmem>>, vector<1x64x128xbf16>
    %1 = vector.shape_cast %0 : vector<1x64x128xbf16> to vector<64x128xbf16>
    %c0_2 = arith.constant 0 : index
    %c0_3 = arith.constant 0 : index
    %2 = vector.load %arg2[%c0_2, %c0_3] : memref<128x128xbf16, #tpu.memory_space<vmem>>, vector<128x128xbf16>
    %cst = arith.constant dense<0.000000e+00> : vector<64x128xf32>
    %3 = tpu.matmul %1, %2, %cst {dimension_numbers = #tpu.dot_dimension_numbers<[1], [0], [0], [1], [0, 0, 1, 1], [], []>} : vector<64x128xbf16>, vector<128x128xbf16>, vector<64x128xf32> -> vector<64x128xf32>
    %c0_4 = arith.constant 0 : index
    %c0_5 = arith.constant 0 : index
    %4 = vector.load %arg3[%c0_4, %c0_5] : memref<1x128xf32, #tpu.memory_space<vmem>>, vector<1x128xf32>
    %5 = vector.broadcast %4 : vector<1x128xf32> to vector<64x128xf32>
    %6 = arith.mulf %3, %5 : vector<64x128xf32>
    %c0_6 = arith.constant 0 : index
    %c0_7 = arith.constant 0 : index
    %7 = vector.load %arg4[%c0_6, %c0_7] : memref<1x128xf32, #tpu.memory_space<vmem>>, vector<1x128xf32>
    %8 = vector.broadcast %7 : vector<1x128xf32> to vector<64x128xf32>
    %9 = arith.addf %6, %8 : vector<64x128xf32>
    %cst_8 = arith.constant 0.000000e+00 : f32
    %10 = vector.broadcast %cst_8 : f32 to vector<64x128xf32>
    %11 = arith.maximumf %9, %10 : vector<64x128xf32>
    %cst_9 = arith.constant 0.000000e+00 : f32
    %12 = vector.broadcast %cst_9 : f32 to vector<10x10x128xf32>
    %c0_10 = arith.constant 0 : index
    %c0_11 = arith.constant 0 : index
    %c0_12 = arith.constant 0 : index
    %13 = vector.load %arg13[%c0_10, %c0_11, %c0_12] : memref<10x10x128xf32, #tpu.memory_space<vmem>>, vector<10x10x128xf32>
    tpu.vector_store %arg13[%c0_10, %c0_11, %c0_12], %12 {strides = array<i32>} : memref<10x10x128xf32, #tpu.memory_space<vmem>>, vector<10x10x128xf32>,
    %14 = vector.shape_cast %11 : vector<64x128xf32> to vector<8x8x128xf32>
    %c1 = arith.constant 1 : index
    %c1_13 = arith.constant 1 : index
    %c0_14 = arith.constant 0 : index
    %15 = vector.load %arg13[%c1, %c1_13, %c0_14] : memref<10x10x128xf32, #tpu.memory_space<vmem>>, vector<8x8x128xf32>
    tpu.vector_store %arg13[%c1, %c1_13, %c0_14], %14 {strides = array<i32>} : memref<10x10x128xf32, #tpu.memory_space<vmem>>, vector<8x8x128xf32>,
    %c0_15 = arith.constant 0 : index
    %c0_16 = arith.constant 0 : index
    %c0_17 = arith.constant 0 : index
    %16 = vector.load %arg13[%c0_15, %c0_16, %c0_17] : memref<10x10x128xf32, #tpu.memory_space<vmem>>, vector<10x10x128xf32>
    %17 = arith.truncf %16 : vector<10x10x128xf32> to vector<10x10x128xbf16>
    %18 = vector.extract_strided_slice %17 {offsets = [0, 0, 0], sizes = [8, 8, 128], strides = [1, 1, 1]} : vector<10x10x128xbf16> to vector<8x8x128xbf16>
    %19 = vector.shape_cast %18 : vector<8x8x128xbf16> to vector<64x128xbf16>
    %c0_18 = arith.constant 0 : index
    %c0_19 = arith.constant 0 : index
    %c0_20 = arith.constant 0 : index
    %20 = vector.load %arg5[%c0_18, %c0_19, %c0_20] : memref<9x128x128xbf16, #tpu.memory_space<vmem>>, vector<1x128x128xbf16>
    %21 = vector.shape_cast %20 : vector<1x128x128xbf16> to vector<128x128xbf16>
    %cst_21 = arith.constant dense<0.000000e+00> : vector<64x128xf32>
    %22 = tpu.matmul %19, %21, %cst_21 {dimension_numbers = #tpu.dot_dimension_numbers<[1], [0], [0], [1], [0, 0, 1, 1], [], []>} : vector<64x128xbf16>, vector<128x128xbf16>, vector<64x128xf32> -> vector<64x128xf32>
    %23 = vector.extract_strided_slice %17 {offsets = [0, 1, 0], sizes = [8, 8, 128], strides = [1, 1, 1]} : vector<10x10x128xbf16> to vector<8x8x128xbf16>
    %24 = vector.shape_cast %23 : vector<8x8x128xbf16> to vector<64x128xbf16>
    %c1_22 = arith.constant 1 : index
    %c0_23 = arith.constant 0 : index
    %c0_24 = arith.constant 0 : index
    %25 = vector.load %arg5[%c1_22, %c0_23, %c0_24] : memref<9x128x128xbf16, #tpu.memory_space<vmem>>, vector<1x128x128xbf16>
    %26 = vector.shape_cast %25 : vector<1x128x128xbf16> to vector<128x128xbf16>
    %cst_25 = arith.constant dense<0.000000e+00> : vector<64x128xf32>
    %27 = tpu.matmul %24, %26, %cst_25 {dimension_numbers = #tpu.dot_dimension_numbers<[1], [0], [0], [1], [0, 0, 1, 1], [], []>} : vector<64x128xbf16>, vector<128x128xbf16>, vector<64x128xf32> -> vector<64x128xf32>
    %28 = arith.addf %22, %27 : vector<64x128xf32>
    %29 = vector.extract_strided_slice %17 {offsets = [0, 2, 0], sizes = [8, 8, 128], strides = [1, 1, 1]} : vector<10x10x128xbf16> to vector<8x8x128xbf16>
    %30 = vector.shape_cast %29 : vector<8x8x128xbf16> to vector<64x128xbf16>
    %c2 = arith.constant 2 : index
    %c0_26 = arith.constant 0 : index
    %c0_27 = arith.constant 0 : index
    %31 = vector.load %arg5[%c2, %c0_26, %c0_27] : memref<9x128x128xbf16, #tpu.memory_space<vmem>>, vector<1x128x128xbf16>
    %32 = vector.shape_cast %31 : vector<1x128x128xbf16> to vector<128x128xbf16>
    %cst_28 = arith.constant dense<0.000000e+00> : vector<64x128xf32>
    %33 = tpu.matmul %30, %32, %cst_28 {dimension_numbers = #tpu.dot_dimension_numbers<[1], [0], [0], [1], [0, 0, 1, 1], [], []>} : vector<64x128xbf16>, vector<128x128xbf16>, vector<64x128xf32> -> vector<64x128xf32>
    %34 = arith.addf %28, %33 : vector<64x128xf32>
    %35 = vector.extract_strided_slice %17 {offsets = [1, 0, 0], sizes = [8, 8, 128], strides = [1, 1, 1]} : vector<10x10x128xbf16> to vector<8x8x128xbf16>
    %36 = vector.shape_cast %35 : vector<8x8x128xbf16> to vector<64x128xbf16>
    %c3 = arith.constant 3 : index
    %c0_29 = arith.constant 0 : index
    %c0_30 = arith.constant 0 : index
    %37 = vector.load %arg5[%c3, %c0_29, %c0_30] : memref<9x128x128xbf16, #tpu.memory_space<vmem>>, vector<1x128x128xbf16>
    %38 = vector.shape_cast %37 : vector<1x128x128xbf16> to vector<128x128xbf16>
    %cst_31 = arith.constant dense<0.000000e+00> : vector<64x128xf32>
    %39 = tpu.matmul %36, %38, %cst_31 {dimension_numbers = #tpu.dot_dimension_numbers<[1], [0], [0], [1], [0, 0, 1, 1], [], []>} : vector<64x128xbf16>, vector<128x128xbf16>, vector<64x128xf32> -> vector<64x128xf32>
    %40 = arith.addf %34, %39 : vector<64x128xf32>
    %41 = vector.extract_strided_slice %17 {offsets = [1, 1, 0], sizes = [8, 8, 128], strides = [1, 1, 1]} : vector<10x10x128xbf16> to vector<8x8x128xbf16>
    %42 = vector.shape_cast %41 : vector<8x8x128xbf16> to vector<64x128xbf16>
    %c4 = arith.constant 4 : index
    %c0_32 = arith.constant 0 : index
    %c0_33 = arith.constant 0 : index
    %43 = vector.load %arg5[%c4, %c0_32, %c0_33] : memref<9x128x128xbf16, #tpu.memory_space<vmem>>, vector<1x128x128xbf16>
    %44 = vector.shape_cast %43 : vector<1x128x128xbf16> to vector<128x128xbf16>
    %cst_34 = arith.constant dense<0.000000e+00> : vector<64x128xf32>
    %45 = tpu.matmul %42, %44, %cst_34 {dimension_numbers = #tpu.dot_dimension_numbers<[1], [0], [0], [1], [0, 0, 1, 1], [], []>} : vector<64x128xbf16>, vector<128x128xbf16>, vector<64x128xf32> -> vector<64x128xf32>
    %46 = arith.addf %40, %45 : vector<64x128xf32>
    %47 = vector.extract_strided_slice %17 {offsets = [1, 2, 0], sizes = [8, 8, 128], strides = [1, 1, 1]} : vector<10x10x128xbf16> to vector<8x8x128xbf16>
    %48 = vector.shape_cast %47 : vector<8x8x128xbf16> to vector<64x128xbf16>
    %c5 = arith.constant 5 : index
    %c0_35 = arith.constant 0 : index
    %c0_36 = arith.constant 0 : index
    %49 = vector.load %arg5[%c5, %c0_35, %c0_36] : memref<9x128x128xbf16, #tpu.memory_space<vmem>>, vector<1x128x128xbf16>
    %50 = vector.shape_cast %49 : vector<1x128x128xbf16> to vector<128x128xbf16>
    %cst_37 = arith.constant dense<0.000000e+00> : vector<64x128xf32>
    %51 = tpu.matmul %48, %50, %cst_37 {dimension_numbers = #tpu.dot_dimension_numbers<[1], [0], [0], [1], [0, 0, 1, 1], [], []>} : vector<64x128xbf16>, vector<128x128xbf16>, vector<64x128xf32> -> vector<64x128xf32>
    %52 = arith.addf %46, %51 : vector<64x128xf32>
    %53 = vector.extract_strided_slice %17 {offsets = [2, 0, 0], sizes = [8, 8, 128], strides = [1, 1, 1]} : vector<10x10x128xbf16> to vector<8x8x128xbf16>
    %54 = vector.shape_cast %53 : vector<8x8x128xbf16> to vector<64x128xbf16>
    %c6 = arith.constant 6 : index
    %c0_38 = arith.constant 0 : index
    %c0_39 = arith.constant 0 : index
    %55 = vector.load %arg5[%c6, %c0_38, %c0_39] : memref<9x128x128xbf16, #tpu.memory_space<vmem>>, vector<1x128x128xbf16>
    %56 = vector.shape_cast %55 : vector<1x128x128xbf16> to vector<128x128xbf16>
    %cst_40 = arith.constant dense<0.000000e+00> : vector<64x128xf32>
    %57 = tpu.matmul %54, %56, %cst_40 {dimension_numbers = #tpu.dot_dimension_numbers<[1], [0], [0], [1], [0, 0, 1, 1], [], []>} : vector<64x128xbf16>, vector<128x128xbf16>, vector<64x128xf32> -> vector<64x128xf32>
    %58 = arith.addf %52, %57 : vector<64x128xf32>
    %59 = vector.extract_strided_slice %17 {offsets = [2, 1, 0], sizes = [8, 8, 128], strides = [1, 1, 1]} : vector<10x10x128xbf16> to vector<8x8x128xbf16>
    %60 = vector.shape_cast %59 : vector<8x8x128xbf16> to vector<64x128xbf16>
    %c7 = arith.constant 7 : index
    %c0_41 = arith.constant 0 : index
    %c0_42 = arith.constant 0 : index
    %61 = vector.load %arg5[%c7, %c0_41, %c0_42] : memref<9x128x128xbf16, #tpu.memory_space<vmem>>, vector<1x128x128xbf16>
    %62 = vector.shape_cast %61 : vector<1x128x128xbf16> to vector<128x128xbf16>
    %cst_43 = arith.constant dense<0.000000e+00> : vector<64x128xf32>
    %63 = tpu.matmul %60, %62, %cst_43 {dimension_numbers = #tpu.dot_dimension_numbers<[1], [0], [0], [1], [0, 0, 1, 1], [], []>} : vector<64x128xbf16>, vector<128x128xbf16>, vector<64x128xf32> -> vector<64x128xf32>
    %64 = arith.addf %58, %63 : vector<64x128xf32>
    %65 = vector.extract_strided_slice %17 {offsets = [2, 2, 0], sizes = [8, 8, 128], strides = [1, 1, 1]} : vector<10x10x128xbf16> to vector<8x8x128xbf16>
    %66 = vector.shape_cast %65 : vector<8x8x128xbf16> to vector<64x128xbf16>
    %c8 = arith.constant 8 : index
    %c0_44 = arith.constant 0 : index
    %c0_45 = arith.constant 0 : index
    %67 = vector.load %arg5[%c8, %c0_44, %c0_45] : memref<9x128x128xbf16, #tpu.memory_space<vmem>>, vector<1x128x128xbf16>
    %68 = vector.shape_cast %67 : vector<1x128x128xbf16> to vector<128x128xbf16>
    %cst_46 = arith.constant dense<0.000000e+00> : vector<64x128xf32>
    %69 = tpu.matmul %66, %68, %cst_46 {dimension_numbers = #tpu.dot_dimension_numbers<[1], [0], [0], [1], [0, 0, 1, 1], [], []>} : vector<64x128xbf16>, vector<128x128xbf16>, vector<64x128xf32> -> vector<64x128xf32>
    %70 = arith.addf %64, %69 : vector<64x128xf32>
    %c0_47 = arith.constant 0 : index
    %c0_48 = arith.constant 0 : index
    %71 = vector.load %arg6[%c0_47, %c0_48] : memref<1x128xf32, #tpu.memory_space<vmem>>, vector<1x128xf32>
    %72 = vector.broadcast %71 : vector<1x128xf32> to vector<64x128xf32>
    %73 = arith.mulf %70, %72 : vector<64x128xf32>
    %c0_49 = arith.constant 0 : index
    %c0_50 = arith.constant 0 : index
    %74 = vector.load %arg7[%c0_49, %c0_50] : memref<1x128xf32, #tpu.memory_space<vmem>>, vector<1x128xf32>
    %75 = vector.broadcast %74 : vector<1x128xf32> to vector<64x128xf32>
    %76 = arith.addf %73, %75 : vector<64x128xf32>
    %c0_51 = arith.constant 0 : index
    %c0_52 = arith.constant 0 : index
    %c0_53 = arith.constant 0 : index
    %77 = vector.load %arg8[%c0_51, %c0_52, %c0_53] : memref<1x64x128xbf16, #tpu.memory_space<vmem>>, vector<1x64x128xbf16>
    %78 = vector.shape_cast %77 : vector<1x64x128xbf16> to vector<64x128xbf16>
    %c0_54 = arith.constant 0 : index
    %c0_55 = arith.constant 0 : index
    %79 = vector.load %arg9[%c0_54, %c0_55] : memref<128x128xbf16, #tpu.memory_space<vmem>>, vector<128x128xbf16>
    %cst_56 = arith.constant dense<0.000000e+00> : vector<64x128xf32>
    %80 = tpu.matmul %78, %79, %cst_56 {dimension_numbers = #tpu.dot_dimension_numbers<[1], [0], [0], [1], [0, 0, 1, 1], [], []>} : vector<64x128xbf16>, vector<128x128xbf16>, vector<64x128xf32> -> vector<64x128xf32>
    %c0_57 = arith.constant 0 : index
    %c0_58 = arith.constant 0 : index
    %81 = vector.load %arg10[%c0_57, %c0_58] : memref<1x128xf32, #tpu.memory_space<vmem>>, vector<1x128xf32>
    %82 = vector.broadcast %81 : vector<1x128xf32> to vector<64x128xf32>
    %83 = arith.mulf %80, %82 : vector<64x128xf32>
    %c0_59 = arith.constant 0 : index
    %c0_60 = arith.constant 0 : index
    %84 = vector.load %arg11[%c0_59, %c0_60] : memref<1x128xf32, #tpu.memory_space<vmem>>, vector<1x128xf32>
    %85 = vector.broadcast %84 : vector<1x128xf32> to vector<64x128xf32>
    %86 = arith.addf %83, %85 : vector<64x128xf32>
    %87 = arith.addf %76, %86 : vector<64x128xf32>
    %cst_61 = arith.constant 0.000000e+00 : f32
    %88 = vector.broadcast %cst_61 : f32 to vector<64x128xf32>
    %89 = arith.maximumf %87, %88 : vector<64x128xf32>
    %c0_62 = arith.constant 0 : index
    %c0_63 = arith.constant 0 : index
    %c0_64 = arith.constant 0 : index
    %90 = vector.load %arg12[%c0_62, %c0_63, %c0_64] : memref<1x64x128xf32, #tpu.memory_space<vmem>>, vector<1x64x128xf32>
    %91 = vector.shape_cast %90 : vector<1x64x128xf32> to vector<64x128xf32>
    %92 = vector.shape_cast %89 : vector<64x128xf32> to vector<1x64x128xf32>
    tpu.vector_store %arg12[%c0_62, %c0_63, %c0_64], %92 {strides = array<i32>} : memref<1x64x128xf32, #tpu.memory_space<vmem>>, vector<1x64x128xf32>,
    return
  }
  func.func @transform_0(%arg0: i32) -> (i32, i32, i32) {
    %c0_i32 = arith.constant 0 : i32
    %c0_i32_0 = arith.constant 0 : i32
    %c0_i32_1 = arith.constant 0 : i32
    return %arg0, %c0_i32, %c0_i32_0 : i32, i32, i32
  }
  func.func @transform_1(%arg0: i32) -> (i32, i32) {
    %c0_i32 = arith.constant 0 : i32
    %c0_i32_0 = arith.constant 0 : i32
    %c0_i32_1 = arith.constant 0 : i32
    return %c0_i32, %c0_i32_0 : i32, i32
  }
  func.func @transform_2(%arg0: i32) -> (i32, i32) {
    %c0_i32 = arith.constant 0 : i32
    %c0_i32_0 = arith.constant 0 : i32
    %c0_i32_1 = arith.constant 0 : i32
    return %c0_i32, %c0_i32_0 : i32, i32
  }
  func.func @transform_3(%arg0: i32) -> (i32, i32) {
    %c0_i32 = arith.constant 0 : i32
    %c0_i32_0 = arith.constant 0 : i32
    %c0_i32_1 = arith.constant 0 : i32
    return %c0_i32, %c0_i32_0 : i32, i32
  }
  func.func @transform_4(%arg0: i32) -> (i32, i32, i32) {
    %c0_i32 = arith.constant 0 : i32
    %c0_i32_0 = arith.constant 0 : i32
    %c0_i32_1 = arith.constant 0 : i32
    %c0_i32_2 = arith.constant 0 : i32
    return %c0_i32, %c0_i32_0, %c0_i32_1 : i32, i32, i32
  }
  func.func @transform_5(%arg0: i32) -> (i32, i32) {
    %c0_i32 = arith.constant 0 : i32
    %c0_i32_0 = arith.constant 0 : i32
    %c0_i32_1 = arith.constant 0 : i32
    return %c0_i32, %c0_i32_0 : i32, i32
  }
  func.func @transform_6(%arg0: i32) -> (i32, i32) {
    %c0_i32 = arith.constant 0 : i32
    %c0_i32_0 = arith.constant 0 : i32
    %c0_i32_1 = arith.constant 0 : i32
    return %c0_i32, %c0_i32_0 : i32, i32
  }
  func.func @transform_7(%arg0: i32) -> (i32, i32, i32) {
    %c0_i32 = arith.constant 0 : i32
    %c0_i32_0 = arith.constant 0 : i32
    %c0_i32_1 = arith.constant 0 : i32
    return %arg0, %c0_i32, %c0_i32_0 : i32, i32, i32
  }
  func.func @transform_8(%arg0: i32) -> (i32, i32) {
    %c0_i32 = arith.constant 0 : i32
    %c0_i32_0 = arith.constant 0 : i32
    %c0_i32_1 = arith.constant 0 : i32
    return %c0_i32, %c0_i32_0 : i32, i32
  }
  func.func @transform_9(%arg0: i32) -> (i32, i32) {
    %c0_i32 = arith.constant 0 : i32
    %c0_i32_0 = arith.constant 0 : i32
    %c0_i32_1 = arith.constant 0 : i32
    return %c0_i32, %c0_i32_0 : i32, i32
  }
  func.func @transform_10(%arg0: i32) -> (i32, i32) {
    %c0_i32 = arith.constant 0 : i32
    %c0_i32_0 = arith.constant 0 : i32
    %c0_i32_1 = arith.constant 0 : i32
    return %c0_i32, %c0_i32_0 : i32, i32
  }
  func.func @transform_11(%arg0: i32) -> (i32, i32, i32) {
    %c0_i32 = arith.constant 0 : i32
    %c0_i32_0 = arith.constant 0 : i32
    %c0_i32_1 = arith.constant 0 : i32
    return %arg0, %c0_i32, %c0_i32_0 : i32, i32, i32
  }
}

</mosaic_0001>

<llo_original>
// kernel: basic_block_forward.1
$region0: #{basic_block_forward.1}
  #allocation0 [shape = 'u32[]', space=smem, size = 0x4, offset = 0x4, fixed_abs, tag = 'smem constant byte address 0x4 - core index']
  #allocation1 [shape = 'u32[144,128]{1,0:T(1,128)}', space=vmem, size = 0x12000, scoped, tag = 'internal scratch']
  #allocation2 [shape = 'f32[10,10,128]{2,1,0:T(8,128)}', space=vmem, size = 0x14000, scoped, tag = 'scratch operand']
  %s0 = inlined_call_operand.vmem [shape: bf16[2,64,128], index: 0, kind: input, shape index: {}]
  %s1 = inlined_call_operand.vmem [shape: bf16[128,128], index: 1, kind: input, shape index: {}]
  %s2 = inlined_call_operand.vmem [shape: f32[1,128], index: 2, kind: input, shape index: {}]
  %s3 = inlined_call_operand.vmem [shape: f32[1,128], index: 3, kind: input, shape index: {}]
  %s4 = inlined_call_operand.vmem [shape: bf16[9,128,128], index: 4, kind: input, shape index: {}]
  %s5 = inlined_call_operand.vmem [shape: f32[1,128], index: 5, kind: input, shape index: {}]
  %s6 = inlined_call_operand.vmem [shape: f32[1,128], index: 6, kind: input, shape index: {}]
  %s7 = inlined_call_operand.vmem [shape: bf16[2,64,128], index: 7, kind: input, shape index: {}]
  %s8 = inlined_call_operand.vmem [shape: bf16[128,128], index: 8, kind: input, shape index: {}]
  %s9 = inlined_call_operand.vmem [shape: f32[1,128], index: 9, kind: input, shape index: {}]
  %s10 = inlined_call_operand.vmem [shape: f32[1,128], index: 10, kind: input, shape index: {}]
  %s11 = inlined_call_operand.vmem [shape: f32[2,64,128], index: 11, kind: output, shape index: {}]
  %s12 = sld [smem:[#allocation0]]
  $region77: #{basic_block_forward.1} parent=0
    _
  %s14 = ssub.s32 1, %s12
  %s15 = scalar_select 0, %s14, %s12
  loop: start=0, step=1, limit=4
  $region2: #{basic_block_forward.1} parent=0 // loop_pre_header
    _
  $region3: #{basic_block_forward.1} parent=0 // loop_header
    %s17 = sphi 0, %s21
    %p18 = scmp.ge.s32.totalorder %s17, 4
    %s27 = sphi 0, %s29
    %s30 = sphi 0, %s27
    %s31 = sphi 0, %s30
    %s47 = sphi 0, %s31
    %s51 = sphi 0, %s51
    %s53 = sphi 0, %s51
    %s54 = sphi 0, %s53
    %s68 = sphi 0, %s54
    %s72 = sphi 0, %s72
    %s74 = sphi 0, %s72
    %s75 = sphi 0, %s74
    %s89 = sphi 0, %s75
    %s93 = sphi 0, %s93
    %s95 = sphi 0, %s93
    %s96 = sphi 0, %s95
    %s110 = sphi 0, %s96
    %s114 = sphi 0, %s114
    %s116 = sphi 0, %s114
    %s117 = sphi 0, %s116
    %s131 = sphi 0, %s117
    %s135 = sphi 0, %s135
    %s137 = sphi 0, %s135
    %s138 = sphi 0, %s137
    %s152 = sphi 0, %s138
    %s156 = sphi 0, %s156
    %s158 = sphi 0, %s156
    %s159 = sphi 0, %s158
    %s173 = sphi 0, %s159
    %s179 = sphi 0, %s181
    %s182 = sphi 0, %s179
    %s183 = sphi 0, %s182
    %s199 = sphi 0, %s183
    %s203 = sphi 0, %s203
    %s205 = sphi 0, %s203
    %s206 = sphi 0, %s205
    %s220 = sphi 0, %s206
    %s224 = sphi 0, %s224
    %s226 = sphi 0, %s224
    %s227 = sphi 0, %s226
    %s241 = sphi 0, %s227
    %s245 = sphi 0, %s245
    %s247 = sphi 0, %s245
    %s248 = sphi 0, %s247
    %s262 = sphi 0, %s248
    %s268 = sphi 0, %s270
    %s271 = sphi 0, %s268
    %s272 = sphi 0, %s271
    %s288 = sphi 0, %s272
  $region4: #{basic_block_forward.1} parent=0 // loop_header_branch
    %20 = sbr.rel (%p18) target = $region8
  $region5: #{basic_block_forward.1} parent=0 // loop_body
    %s22 = ssub.s32 %s17, 1
    %s23 = ssub.s32 %s17, 2
    %s24 = sadd.s32 %s17, 1
    %s25 = ssub.s32 %s17, %s24
    %p26 = scmp.eq.s32.totalorder %s25, 0
    %s28 = sadd.s32 %s27, 1
    %s29 = scalar_select %p26, %s27, %s28
    %p32 = pneg %p26
    %p33 = scmp.eq.s32.totalorder %s17, 1
    %p34 = por %p32, %p33
    %p35 = scmp.ne.s32.totalorder %s27, %s30
    %p36 = scmp.eq.s32.totalorder %s17, 0
    %p37 = por %p35, %p36
    %p38 = scmp.ne.s32.totalorder %s27, %s30
    %p39 = scmp.eq.s32.totalorder %s22, 1
    %p40 = por %p38, %p39
    %p41 = scmp.ne.s32.totalorder %s30, %s31
    %p42 = scmp.eq.s32.totalorder %s22, 0
    %p43 = por %p41, %p42
    %p44 = scmp.ne.s32.totalorder %s30, %s31
    %p45 = scmp.eq.s32.totalorder %s23, 1
    %p46 = por %p44, %p45
    %p48 = scmp.ne.s32.totalorder %s31, %s47
    %p49 = scmp.eq.s32.totalorder %s23, 0
    %p50 = por %p48, %p49
    %s52 = sadd.s32 %s51, 1
    %p55 = scmp.eq.s32.totalorder %s17, 1
    %p56 = scmp.ne.s32.totalorder %s51, %s53
    %p57 = scmp.eq.s32.totalorder %s17, 0
    %p58 = por %p56, %p57
    %p59 = scmp.ne.s32.totalorder %s51, %s53
    %p60 = scmp.eq.s32.totalorder %s22, 1
    %p61 = por %p59, %p60
    %p62 = scmp.ne.s32.totalorder %s53, %s54
    %p63 = scmp.eq.s32.totalorder %s22, 0
    %p64 = por %p62, %p63
    %p65 = scmp.ne.s32.totalorder %s53, %s54
    %p66 = scmp.eq.s32.totalorder %s23, 1
    %p67 = por %p65, %p66
    %p69 = scmp.ne.s32.totalorder %s54, %s68
    %p70 = scmp.eq.s32.totalorder %s23, 0
    %p71 = por %p69, %p70
    %s73 = sadd.s32 %s72, 1
    %p76 = scmp.eq.s32.totalorder %s17, 1
    %p77 = scmp.ne.s32.totalorder %s72, %s74
    %p78 = scmp.eq.s32.totalorder %s17, 0
    %p79 = por %p77, %p78
    %p80 = scmp.ne.s32.totalorder %s72, %s74
    %p81 = scmp.eq.s32.totalorder %s22, 1
    %p82 = por %p80, %p81
    %p83 = scmp.ne.s32.totalorder %s74, %s75
    %p84 = scmp.eq.s32.totalorder %s22, 0
    %p85 = por %p83, %p84
    %p86 = scmp.ne.s32.totalorder %s74, %s75
    %p87 = scmp.eq.s32.totalorder %s23, 1
    %p88 = por %p86, %p87
    %p90 = scmp.ne.s32.totalorder %s75, %s89
    %p91 = scmp.eq.s32.totalorder %s23, 0
    %p92 = por %p90, %p91
    %s94 = sadd.s32 %s93, 1
    %p97 = scmp.eq.s32.totalorder %s17, 1
    %p98 = scmp.ne.s32.totalorder %s93, %s95
    %p99 = scmp.eq.s32.totalorder %s17, 0
    %p100 = por %p98, %p99
    %p101 = scmp.ne.s32.totalorder %s93, %s95
    %p102 = scmp.eq.s32.totalorder %s22, 1
    %p103 = por %p101, %p102
    %p104 = scmp.ne.s32.totalorder %s95, %s96
    %p105 = scmp.eq.s32.totalorder %s22, 0
    %p106 = por %p104, %p105
    %p107 = scmp.ne.s32.totalorder %s95, %s96
    %p108 = scmp.eq.s32.totalorder %s23, 1
    %p109 = por %p107, %p108
    %p111 = scmp.ne.s32.totalorder %s96, %s110
    %p112 = scmp.eq.s32.totalorder %s23, 0
    %p113 = por %p111, %p112
    %s115 = sadd.s32 %s114, 1
    %p118 = scmp.eq.s32.totalorder %s17, 1
    %p119 = scmp.ne.s32.totalorder %s114, %s116
    %p120 = scmp.eq.s32.totalorder %s17, 0
    %p121 = por %p119, %p120
    %p122 = scmp.ne.s32.totalorder %s114, %s116
    %p123 = scmp.eq.s32.totalorder %s22, 1
    %p124 = por %p122, %p123
    %p125 = scmp.ne.s32.totalorder %s116, %s117
    %p126 = scmp.eq.s32.totalorder %s22, 0
    %p127 = por %p125, %p126
    %p128 = scmp.ne.s32.totalorder %s116, %s117
    %p129 = scmp.eq.s32.totalorder %s23, 1
    %p130 = por %p128, %p129
    %p132 = scmp.ne.s32.totalorder %s117, %s131
    %p133 = scmp.eq.s32.totalorder %s23, 0
    %p134 = por %p132, %p133
    %s136 = sadd.s32 %s135, 1
    %p139 = scmp.eq.s32.totalorder %s17, 1
    %p140 = scmp.ne.s32.totalorder %s135, %s137
    %p141 = scmp.eq.s32.totalorder %s17, 0
    %p142 = por %p140, %p141
    %p143 = scmp.ne.s32.totalorder %s135, %s137
    %p144 = scmp.eq.s32.totalorder %s22, 1
    %p145 = por %p143, %p144
    %p146 = scmp.ne.s32.totalorder %s137, %s138
    %p147 = scmp.eq.s32.totalorder %s22, 0
    %p148 = por %p146, %p147
    %p149 = scmp.ne.s32.totalorder %s137, %s138
    %p150 = scmp.eq.s32.totalorder %s23, 1
    %p151 = por %p149, %p150
    %p153 = scmp.ne.s32.totalorder %s138, %s152
    %p154 = scmp.eq.s32.totalorder %s23, 0
    %p155 = por %p153, %p154
    %s157 = sadd.s32 %s156, 1
    %p160 = scmp.eq.s32.totalorder %s17, 1
    %p161 = scmp.ne.s32.totalorder %s156, %s158
    %p162 = scmp.eq.s32.totalorder %s17, 0
    %p163 = por %p161, %p162
    %p164 = scmp.ne.s32.totalorder %s156, %s158
    %p165 = scmp.eq.s32.totalorder %s22, 1
    %p166 = por %p164, %p165
    %p167 = scmp.ne.s32.totalorder %s158, %s159
    %p168 = scmp.eq.s32.totalorder %s22, 0
    %p169 = por %p167, %p168
    %p170 = scmp.ne.s32.totalorder %s158, %s159
    %p171 = scmp.eq.s32.totalorder %s23, 1
    %p172 = por %p170, %p171
    %p174 = scmp.ne.s32.totalorder %s159, %s173
    %p175 = scmp.eq.s32.totalorder %s23, 0
    %p176 = por %p174, %p175
    %s177 = ssub.s32 %s17, %s24
    %p178 = scmp.eq.s32.totalorder %s177, 0
    %s180 = sadd.s32 %s179, 1
    %s181 = scalar_select %p178, %s179, %s180
    %p184 = pneg %p178
    %p185 = scmp.eq.s32.totalorder %s17, 1
    %p186 = por %p184, %p185
    %p187 = scmp.ne.s32.totalorder %s179, %s182
    %p188 = scmp.eq.s32.totalorder %s17, 0
    %p189 = por %p187, %p188
    %p190 = scmp.ne.s32.totalorder %s179, %s182
    %p191 = scmp.eq.s32.totalorder %s22, 1
    %p192 = por %p190, %p191
    %p193 = scmp.ne.s32.totalorder %s182, %s183
    %p194 = scmp.eq.s32.totalorder %s22, 0
    %p195 = por %p193, %p194
    %p196 = scmp.ne.s32.totalorder %s182, %s183
    %p197 = scmp.eq.s32.totalorder %s23, 1
    %p198 = por %p196, %p197
    %p200 = scmp.ne.s32.totalorder %s183, %s199
    %p201 = scmp.eq.s32.totalorder %s23, 0
    %p202 = por %p200, %p201
    %s204 = sadd.s32 %s203, 1
    %p207 = scmp.eq.s32.totalorder %s17, 1
    %p208 = scmp.ne.s32.totalorder %s203, %s205
    %p209 = scmp.eq.s32.totalorder %s17, 0
    %p210 = por %p208, %p209
    %p211 = scmp.ne.s32.totalorder %s203, %s205
    %p212 = scmp.eq.s32.totalorder %s22, 1
    %p213 = por %p211, %p212
    %p214 = scmp.ne.s32.totalorder %s205, %s206
    %p215 = scmp.eq.s32.totalorder %s22, 0
    %p216 = por %p214, %p215
    %p217 = scmp.ne.s32.totalorder %s205, %s206
    %p218 = scmp.eq.s32.totalorder %s23, 1
    %p219 = por %p217, %p218
    %p221 = scmp.ne.s32.totalorder %s206, %s220
    %p222 = scmp.eq.s32.totalorder %s23, 0
    %p223 = por %p221, %p222
    %s225 = sadd.s32 %s224, 1
    %p228 = scmp.eq.s32.totalorder %s17, 1
    %p229 = scmp.ne.s32.totalorder %s224, %s226
    %p230 = scmp.eq.s32.totalorder %s17, 0
    %p231 = por %p229, %p230
    %p232 = scmp.ne.s32.totalorder %s224, %s226
    %p233 = scmp.eq.s32.totalorder %s22, 1
    %p234 = por %p232, %p233
    %p235 = scmp.ne.s32.totalorder %s226, %s227
    %p236 = scmp.eq.s32.totalorder %s22, 0
    %p237 = por %p235, %p236
    %p238 = scmp.ne.s32.totalorder %s226, %s227
    %p239 = scmp.eq.s32.totalorder %s23, 1
    %p240 = por %p238, %p239
    %p242 = scmp.ne.s32.totalorder %s227, %s241
    %p243 = scmp.eq.s32.totalorder %s23, 0
    %p244 = por %p242, %p243
    %s246 = sadd.s32 %s245, 1
    %p249 = scmp.eq.s32.totalorder %s17, 1
    %p250 = scmp.ne.s32.totalorder %s245, %s247
    %p251 = scmp.eq.s32.totalorder %s17, 0
    %p252 = por %p250, %p251
    %p253 = scmp.ne.s32.totalorder %s245, %s247
    %p254 = scmp.eq.s32.totalorder %s22, 1
    %p255 = por %p253, %p254
    %p256 = scmp.ne.s32.totalorder %s247, %s248
    %p257 = scmp.eq.s32.totalorder %s22, 0
    %p258 = por %p256, %p257
    %p259 = scmp.ne.s32.totalorder %s247, %s248
    %p260 = scmp.eq.s32.totalorder %s23, 1
    %p261 = por %p259, %p260
    %p263 = scmp.ne.s32.totalorder %s248, %s262
    %p264 = scmp.eq.s32.totalorder %s23, 0
    %p265 = por %p263, %p264
    %s266 = ssub.s32 %s17, %s24
    %p267 = scmp.eq.s32.totalorder %s266, 0
    %s269 = sadd.s32 %s268, 1
    %s270 = scalar_select %p267, %s268, %s269
    %p273 = pneg %p267
    %p274 = scmp.eq.s32.totalorder %s17, 1
    %p275 = por %p273, %p274
    %p276 = scmp.ne.s32.totalorder %s268, %s271
    %p277 = scmp.eq.s32.totalorder %s17, 0
    %p278 = por %p276, %p277
    %p279 = scmp.ne.s32.totalorder %s268, %s271
    %p280 = scmp.eq.s32.totalorder %s22, 1
    %p281 = por %p279, %p280
    %p282 = scmp.ne.s32.totalorder %s271, %s272
    %p283 = scmp.eq.s32.totalorder %s22, 0
    %p284 = por %p282, %p283
    %p285 = scmp.ne.s32.totalorder %s271, %s272
    %p286 = scmp.eq.s32.totalorder %s23, 1
    %p287 = por %p285, %p286
    %p289 = scmp.ne.s32.totalorder %s272, %s288
    %p290 = scmp.eq.s32.totalorder %s23, 0
    %p291 = por %p289, %p290
    %p292 = scmp.le.s32.totalorder 1, %s17
    %p293 = scmp.lt.s32.totalorder %s17, 3
    %p294 = pnand %p292, %p293
    %p295 = pneg %p294
    // Predicated region
    $region9: #{basic_block_forward.1} parent=5 // pred_check
      _
    $region10: #{basic_block_forward.1} parent=5 // pred_check_branch
      %297 = sbr.rel (%p294) target = $region12
    $region11: #{basic_block_forward.1} parent=5 // pred_region
      %s298 = ssub.s32 %s17, 1
      // Predicated region
      $region13: #{basic_block_forward.1} parent=11 // pred_check
        %p299 = pneg %p64
      $region14: #{basic_block_forward.1} parent=11 // pred_check_branch
        %301 = sbr.rel (%p299) target = $region16
      $region15: #{basic_block_forward.1} parent=11 // pred_region
        _
      $region16: #{basic_block_forward.1} parent=11 // pred_fallthru
        _
      // Predicated region
      $region17: #{basic_block_forward.1} parent=11 // pred_check
        %p302 = pneg %p85
      $region18: #{basic_block_forward.1} parent=11 // pred_check_branch
        %304 = sbr.rel (%p302) target = $region20
      $region19: #{basic_block_forward.1} parent=11 // pred_region
        _
      $region20: #{basic_block_forward.1} parent=11 // pred_fallthru
        _
      // Predicated region
      $region21: #{basic_block_forward.1} parent=11 // pred_check
        %p305 = pneg %p106
      $region22: #{basic_block_forward.1} parent=11 // pred_check_branch
        %307 = sbr.rel (%p305) target = $region24
      $region23: #{basic_block_forward.1} parent=11 // pred_region
        _
      $region24: #{basic_block_forward.1} parent=11 // pred_fallthru
        _
      // Predicated region
      $region25: #{basic_block_forward.1} parent=11 // pred_check
        %p308 = pneg %p127
      $region26: #{basic_block_forward.1} parent=11 // pred_check_branch
        %310 = sbr.rel (%p308) target = $region28
      $region27: #{basic_block_forward.1} parent=11 // pred_region
        _
      $region28: #{basic_block_forward.1} parent=11 // pred_fallthru
        _
      // Predicated region
      $region29: #{basic_block_forward.1} parent=11 // pred_check
        %p311 = pneg %p148
      $region30: #{basic_block_forward.1} parent=11 // pred_check_branch
        %313 = sbr.rel (%p311) target = $region32
      $region31: #{basic_block_forward.1} parent=11 // pred_region
        _
      $region32: #{basic_block_forward.1} parent=11 // pred_fallthru
        _
      // Predicated region
      $region33: #{basic_block_forward.1} parent=11 // pred_check
        %p314 = pneg %p169
      $region34: #{basic_block_forward.1} parent=11 // pred_check_branch
        %316 = sbr.rel (%p314) target = $region36
      $region35: #{basic_block_forward.1} parent=11 // pred_region
        _
      $region36: #{basic_block_forward.1} parent=11 // pred_fallthru
        _
      // Predicated region
      $region37: #{basic_block_forward.1} parent=11 // pred_check
        %p317 = pneg %p216
      $region38: #{basic_block_forward.1} parent=11 // pred_check_branch
        %319 = sbr.rel (%p317) target = $region40
      $region39: #{basic_block_forward.1} parent=11 // pred_region
        _
      $region40: #{basic_block_forward.1} parent=11 // pred_fallthru
        _
      // Predicated region
      $region41: #{basic_block_forward.1} parent=11 // pred_check
        %p320 = pneg %p237
      $region42: #{basic_block_forward.1} parent=11 // pred_check_branch
        %322 = sbr.rel (%p320) target = $region44
      $region43: #{basic_block_forward.1} parent=11 // pred_region
        _
      $region44: #{basic_block_forward.1} parent=11 // pred_fallthru
        _
      // Predicated region
      $region45: #{basic_block_forward.1} parent=11 // pred_check
        %p323 = pneg %p258
      $region46: #{basic_block_forward.1} parent=11 // pred_check_branch
        %325 = sbr.rel (%p323) target = $region48
      $region47: #{basic_block_forward.1} parent=11 // pred_region
        _
      $region48: #{basic_block_forward.1} parent=11 // pred_fallthru
        _
    $region12: #{basic_block_forward.1} parent=5 // pred_fallthru
      _
    %p326 = scmp.lt.s32.totalorder %s17, 2
    // Predicated region
    $region49: #{basic_block_forward.1} parent=5 // pred_check
      %p327 = pneg %p326
    $region50: #{basic_block_forward.1} parent=5 // pred_check_branch
      %329 = sbr.rel (%p327) target = $region52
    $region51: #{basic_block_forward.1} parent=5 // pred_region
      // Predicated region
      $region53: #{basic_block_forward.1} parent=51 // pred_check
        %p330 = pneg %p37
      $region54: #{basic_block_forward.1} parent=51 // pred_check_branch
        %332 = sbr.rel (%p330) target = $region56
      $region55: #{basic_block_forward.1} parent=51 // pred_region
        %p333 = scmp.lt.s32.totalorder %s17, 1
        %s334 = scalar_select %p333, %s17, 1
        %s335 = smul.addr %s334, 8
        %s336 = smul.addr %s335, 4
        %s337 = scalar_lea.vmem %s0, %s336
      $region56: #{basic_block_forward.1} parent=51 // pred_fallthru
        _
      // Predicated region
      $region57: #{basic_block_forward.1} parent=51 // pred_check
        %p338 = pneg %p189
      $region58: #{basic_block_forward.1} parent=51 // pred_check_branch
        %340 = sbr.rel (%p338) target = $region60
      $region59: #{basic_block_forward.1} parent=51 // pred_region
        %p341 = scmp.lt.s32.totalorder %s17, 1
        %s342 = scalar_select %p341, %s17, 1
        %s343 = smul.addr %s342, 8
        %s344 = smul.addr %s343, 4
        %s345 = scalar_lea.vmem %s7, %s344
      $region60: #{basic_block_forward.1} parent=51 // pred_fallthru
        _
    $region52: #{basic_block_forward.1} parent=5 // pred_fallthru
      _
    %p346 = scmp.le.s32.totalorder 1, %s17
    %p347 = scmp.lt.s32.totalorder %s17, 3
    %p348 = pnand %p346, %p347
    %p349 = pneg %p348
    // Predicated region
    $region61: #{basic_block_forward.1} parent=5 // pred_check
      _
    $region62: #{basic_block_forward.1} parent=5 // pred_check_branch
      %351 = sbr.rel (%p348) target = $region64
    $region63: #{basic_block_forward.1} parent=5 // pred_region
      %s352 = ssub.s32 %s17, 1
      %p353 = scmp.lt.s32.totalorder %s22, 1
      %s354 = scalar_select %p353, %s22, 1
      %s355 = smul.addr %s354, 8
      %s356 = smul.addr %s355, 4
      %s357 = scalar_lea.vmem %s0, %s356
      %p358 = pneg %p43
      %p359 = pneg %p40
      %p360 = pneg %p64
      %p361 = pneg %p61
      %p362 = pneg %p85
      %p363 = pneg %p82
      %p364 = pneg %p106
      %p365 = pneg %p103
      %p366 = pneg %p127
      %p367 = pneg %p124
      %p368 = pneg %p148
      %p369 = pneg %p145
      %p370 = pneg %p169
      %p371 = pneg %p166
      %p372 = scmp.lt.s32.totalorder %s22, 1
      %s373 = scalar_select %p372, %s22, 1
      %s374 = smul.addr %s373, 8
      %s375 = smul.addr %s374, 4
      %s376 = scalar_lea.vmem %s7, %s375
      %p377 = pneg %p195
      %p378 = pneg %p192
      %p379 = pneg %p216
      %p380 = pneg %p213
      %p381 = pneg %p237
      %p382 = pneg %p234
      %p383 = pneg %p258
      %p384 = pneg %p255
      %p385 = pneg %p284
      %p386 = pneg %p281
      %p387 = scmp.lt.s32.totalorder %s22, 1
      %s388 = scalar_select %p387, %s22, 1
      %s389 = smul.addr %s388, 8
      %s390 = smul.addr %s389, 8
      %s391 = scalar_lea.vmem %s11, %s390
      %p392 = scmp.lt.s32.totalorder %s22, 1
      %s393 = scalar_select %p392, %s22, 1
      %s394 = smul.addr %s393, 8
      %s395 = smul.addr %s394, 4
      %s396 = scalar_lea.vmem %s0, %s395
      %p397 = scmp.lt.s32.totalorder %s22, 1
      %s398 = scalar_select %p397, %s22, 1
      %s399 = smul.addr %s398, 8
      %s400 = smul.addr %s399, 4
      %s401 = scalar_lea.vmem %s7, %s400
      %p402 = scmp.lt.s32.totalorder %s22, 1
      %s403 = scalar_select %p402, %s22, 1
      %s404 = smul.addr %s403, 8
      %s405 = smul.addr %s404, 8
      %s406 = scalar_lea.vmem %s11, %s405
      %v408 = vld [vmem:[%s396] sm:$0xf]
      %v409 = vld [vmem:[%s396 + $0x4] sm:$0xf]
      %v410 = vld [vmem:[%s396 + $0x8] sm:$0xf]
      %v411 = vld [vmem:[%s396 + $0xc] sm:$0xf]
      %v412 = vld [vmem:[%s396 + $0x10] sm:$0xf]
      %v413 = vld [vmem:[%s396 + $0x14] sm:$0xf]
      %v414 = vld [vmem:[%s396 + $0x18] sm:$0xf]
      %v415 = vld [vmem:[%s396 + $0x1c] sm:$0xf]
      %v416 = vld [vmem:[%s1] sm:$0xf]
      %v417 = vld [vmem:[%s1 + $0x4] sm:$0xf]
      %v418 = vld [vmem:[%s1 + $0x8] sm:$0xf]
      %v419 = vld [vmem:[%s1 + $0xc] sm:$0xf]
      %v420 = vld [vmem:[%s1 + $0x10] sm:$0xf]
      %v421 = vld [vmem:[%s1 + $0x14] sm:$0xf]
      %v422 = vld [vmem:[%s1 + $0x18] sm:$0xf]
      %v423 = vld [vmem:[%s1 + $0x1c] sm:$0xf]
      %v424 = vld [vmem:[%s1 + $0x20] sm:$0xf]
      %v425 = vld [vmem:[%s1 + $0x24] sm:$0xf]
      %v426 = vld [vmem:[%s1 + $0x28] sm:$0xf]
      %v427 = vld [vmem:[%s1 + $0x2c] sm:$0xf]
      %v428 = vld [vmem:[%s1 + $0x30] sm:$0xf]
      %v429 = vld [vmem:[%s1 + $0x34] sm:$0xf]
      %v430 = vld [vmem:[%s1 + $0x38] sm:$0xf]
      %v431 = vld [vmem:[%s1 + $0x3c] sm:$0xf]
      %v440 = vunpack.c.l.b16 %v408
      %v441 = vunpack.c.l.b16 %v409
      %v442 = vunpack.c.l.b16 %v410
      %v443 = vunpack.c.l.b16 %v411
      %v444 = vunpack.c.l.b16 %v412
      %v445 = vunpack.c.l.b16 %v413
      %v446 = vunpack.c.l.b16 %v414
      %v447 = vunpack.c.l.b16 %v415
      %v448 = vpack.c.b16 %v441, %v440
      %v449 = vpack.c.b16 %v443, %v442
      %v450 = vpack.c.b16 %v445, %v444
      %v451 = vpack.c.b16 %v447, %v446
      %v472 = vunpack.c.l.b16 %v416
      %v473 = vunpack.c.l.b16 %v417
      %v474 = vunpack.c.l.b16 %v418
      %v475 = vunpack.c.l.b16 %v419
      %v476 = vunpack.c.l.b16 %v420
      %v477 = vunpack.c.l.b16 %v421
      %v478 = vunpack.c.l.b16 %v422
      %v479 = vunpack.c.l.b16 %v423
      %v480 = vunpack.c.l.b16 %v424
      %v481 = vunpack.c.l.b16 %v425
      %v482 = vunpack.c.l.b16 %v426
      %v483 = vunpack.c.l.b16 %v427
      %v484 = vunpack.c.l.b16 %v428
      %v485 = vunpack.c.l.b16 %v429
      %v486 = vunpack.c.l.b16 %v430
      %v487 = vunpack.c.l.b16 %v431
      %v488 = vpack.c.b16 %v473, %v472
      %v489 = vpack.c.b16 %v475, %v474
      %v490 = vpack.c.b16 %v477, %v476
      %v491 = vpack.c.b16 %v479, %v478
      %v492 = vpack.c.b16 %v481, %v480
      %v493 = vpack.c.b16 %v483, %v482
      %v494 = vpack.c.b16 %v485, %v484
      %v495 = vpack.c.b16 %v487, %v486
      %504 = vmatprep.subr.bf16.mxu0 0
      %505 = vmatpush1.bf16.msra.mxu0 %v488
      %506 = vmatprep.subr.bf16.mxu0 0
      %507 = vmatpush1.bf16.msra.mxu0 %v489
      %508 = vmatprep.subr.bf16.mxu0 0
      %509 = vmatpush1.bf16.msra.mxu0 %v490
      %510 = vmatprep.subr.bf16.mxu0 0
      %511 = vmatpush1.bf16.msra.mxu0 %v491
      %512 = vmatprep.subr.bf16.mxu0 0
      %513 = vmatpush1.bf16.msra.mxu0 %v492
      %514 = vmatprep.subr.bf16.mxu0 0
      %515 = vmatpush1.bf16.msra.mxu0 %v493
      %516 = vmatprep.subr.bf16.mxu0 0
      %517 = vmatpush1.bf16.msra.mxu0 %v494
      %518 = vmatprep.subr.bf16.mxu0 0
      %519 = vmatpush1.bf16.msra.mxu0 %v495
      %520 = vmatprep.subr.bf16.mxu0 0
      %521 = vmatpush1.bf16.msra.mxu0 0
      %522 = vmatprep.subr.bf16.mxu0 0
      %523 = vmatpush1.bf16.msra.mxu0 0
      %524 = vmatprep.subr.bf16.mxu0 0
      %525 = vmatpush1.bf16.msra.mxu0 0
      %526 = vmatprep.subr.bf16.mxu0 0
      %527 = vmatpush1.bf16.msra.mxu0 0
      %528 = vmatprep.subr.bf16.mxu0 0
      %529 = vmatpush1.bf16.msra.mxu0 0
      %530 = vmatprep.subr.bf16.mxu0 0
      %531 = vmatpush1.bf16.msra.mxu0 0
      %532 = vmatprep.subr.bf16.mxu0 0
      %533 = vmatpush1.bf16.msra.mxu0 0
      %534 = vmatprep.subr.bf16.mxu0 0
      %535 = vmatpush1.bf16.msra.mxu0 0
      %536 = vmatprep.mubr.bf16.mxu0 0
      %537 = vmatmul.mubr.bf16.gmra.mrb[0].mxu0 %v448
      %v538 = vpop.f32.mrb[0].mxu0
      %v539 = vadd.f32 0.0, %v538
      %v540 = vpop.f32.mrb[0].mxu0
      %v541 = vpop.f32.mrb[0].mxu0
      %v542 = vadd.f32 0.0, %v541
      %v543 = vpop.f32.mrb[0].mxu0
      %544 = vmatprep.mubr.bf16.mxu0 0
      %545 = vmatmul.mubr.bf16.gmra.mrb[0].mxu0 %v449
      %v546 = vpop.f32.mrb[0].mxu0
      %v547 = vadd.f32 0.0, %v546
      %v548 = vpop.f32.mrb[0].mxu0
      %v549 = vpop.f32.mrb[0].mxu0
      %v550 = vadd.f32 0.0, %v549
      %v551 = vpop.f32.mrb[0].mxu0
      %552 = vmatprep.mubr.bf16.mxu0 0
      %553 = vmatmul.mubr.bf16.gmra.mrb[0].mxu0 %v450
      %v554 = vpop.f32.mrb[0].mxu0
      %v555 = vadd.f32 0.0, %v554
      %v556 = vpop.f32.mrb[0].mxu0
      %v557 = vpop.f32.mrb[0].mxu0
      %v558 = vadd.f32 0.0, %v557
      %v559 = vpop.f32.mrb[0].mxu0
      %560 = vmatprep.mubr.bf16.mxu0 0
      %561 = vmatmul.mubr.bf16.gmra.mrb[0].mxu0 %v451
      %v562 = vpop.f32.mrb[0].mxu0
      %v563 = vadd.f32 0.0, %v562
      %v564 = vpop.f32.mrb[0].mxu0
      %v565 = vpop.f32.mrb[0].mxu0
      %v566 = vadd.f32 0.0, %v565
      %v567 = vpop.f32.mrb[0].mxu0
      %568 = vdwg.mxu0
      %v569 = vld [vmem:[%s2] sm:$0x1]
      %v571 = vlaneseq
      %v572 = vshrl.u32 %v571, 7
      %v573 = vsub.s32 0, %v572
      %v574 = vrot.slane %v569, %v573
      %v576 = vmul.f32 %v539, %v574
      %v577 = vmul.f32 %v542, %v574
      %v578 = vmul.f32 %v547, %v574
      %v579 = vmul.f32 %v550, %v574
      %v580 = vmul.f32 %v555, %v574
      %v581 = vmul.f32 %v558, %v574
      %v582 = vmul.f32 %v563, %v574
      %v583 = vmul.f32 %v566, %v574
      %v584 = vld [vmem:[%s3] sm:$0x1]
      %v586 = vlaneseq
      %v587 = vshrl.u32 %v586, 7
      %v588 = vsub.s32 0, %v587
      %v589 = vrot.slane %v584, %v588
      %v591 = vadd.f32 %v576, %v589
      %v592 = vadd.f32 %v577, %v589
      %v593 = vadd.f32 %v578, %v589
      %v594 = vadd.f32 %v579, %v589
      %v595 = vadd.f32 %v580, %v589
      %v596 = vadd.f32 %v581, %v589
      %v597 = vadd.f32 %v582, %v589
      %v598 = vadd.f32 %v583, %v589
      %v599 = vmax.f32 %v591, 0.0
      %v600 = vmax.f32 %v592, 0.0
      %v601 = vmax.f32 %v593, 0.0
      %v602 = vmax.f32 %v594, 0.0
      %v603 = vmax.f32 %v595, 0.0
      %v604 = vmax.f32 %v596, 0.0
      %v605 = vmax.f32 %v597, 0.0
      %v606 = vmax.f32 %v598, 0.0
      %607 = vst [vmem:[#allocation2] sm:$0xff] 0.0
      %608 = vst [vmem:[#allocation2 + $0x8] sm:$0x3] 0.0
      %609 = vst [vmem:[#allocation2 + $0x10] sm:$0xff] 0.0
      %610 = vst [vmem:[#allocation2 + $0x18] sm:$0x3] 0.0
      %611 = vst [vmem:[#allocation2 + $0x20] sm:$0xff] 0.0
      %612 = vst [vmem:[#allocation2 + $0x28] sm:$0x3] 0.0
      %613 = vst [vmem:[#allocation2 + $0x30] sm:$0xff] 0.0
      %614 = vst [vmem:[#allocation2 + $0x38] sm:$0x3] 0.0
      %615 = vst [vmem:[#allocation2 + $0x40] sm:$0xff] 0.0
      %616 = vst [vmem:[#allocation2 + $0x48] sm:$0x3] 0.0
      %617 = vst [vmem:[#allocation2 + $0x50] sm:$0xff] 0.0
      %618 = vst [vmem:[#allocation2 + $0x58] sm:$0x3] 0.0
      %619 = vst [vmem:[#allocation2 + $0x60] sm:$0xff] 0.0
      %620 = vst [vmem:[#allocation2 + $0x68] sm:$0x3] 0.0
      %621 = vst [vmem:[#allocation2 + $0x70] sm:$0xff] 0.0
      %622 = vst [vmem:[#allocation2 + $0x78] sm:$0x3] 0.0
      %623 = vst [vmem:[#allocation2 + $0x80] sm:$0xff] 0.0
      %624 = vst [vmem:[#allocation2 + $0x88] sm:$0x3] 0.0
      %625 = vst [vmem:[#allocation2 + $0x90] sm:$0xff] 0.0
      %626 = vst [vmem:[#allocation2 + $0x98] sm:$0x3] 0.0
      %s627 = scalar_lea.vmem [#allocation2], 16
      %628 = vst [vmem:[%s627 + $0x1] sm:$0xff] %v599
      %629 = vst [vmem:[%s627 + $0x11] sm:$0xff] %v600
      %630 = vst [vmem:[%s627 + $0x21] sm:$0xff] %v601
      %631 = vst [vmem:[%s627 + $0x31] sm:$0xff] %v602
      %632 = vst [vmem:[%s627 + $0x41] sm:$0xff] %v603
      %633 = vst [vmem:[%s627 + $0x51] sm:$0xff] %v604
      %634 = vst [vmem:[%s627 + $0x61] sm:$0xff] %v605
      %635 = vst [vmem:[%s627 + $0x71] sm:$0xff] %v606
      %v636 = vld [vmem:[#allocation2] sm:$0xff]
      %v637 = vld [vmem:[#allocation2 + $0x8] sm:$0x3]
      %v638 = vld [vmem:[#allocation2 + $0x10] sm:$0xff]
      %v639 = vld [vmem:[#allocation2 + $0x18] sm:$0x3]
      %v640 = vld [vmem:[#allocation2 + $0x20] sm:$0xff]
      %v641 = vld [vmem:[#allocation2 + $0x28] sm:$0x3]
      %v642 = vld [vmem:[#allocation2 + $0x30] sm:$0xff]
      %v643 = vld [vmem:[#allocation2 + $0x38] sm:$0x3]
      %v644 = vld [vmem:[#allocation2 + $0x40] sm:$0xff]
      %v645 = vld [vmem:[#allocation2 + $0x48] sm:$0x3]
      %v646 = vld [vmem:[#allocation2 + $0x50] sm:$0xff]
      %v647 = vld [vmem:[#allocation2 + $0x58] sm:$0x3]
      %v648 = vld [vmem:[#allocation2 + $0x60] sm:$0xff]
      %v649 = vld [vmem:[#allocation2 + $0x68] sm:$0x3]
      %v650 = vld [vmem:[#allocation2 + $0x70] sm:$0xff]
      %v651 = vld [vmem:[#allocation2 + $0x78] sm:$0x3]
      %v652 = vld [vmem:[#allocation2 + $0x80] sm:$0xff]
      %v653 = vld [vmem:[#allocation2 + $0x88] sm:$0x3]
      %v654 = vld [vmem:[#allocation2 + $0x90] sm:$0xff]
      %v655 = vld [vmem:[#allocation2 + $0x98] sm:$0x3]
      %v656 = vpack.c.bf16 %v637, %v636
      %v657 = vpack.c.bf16 %v639, %v638
      %v658 = vpack.c.bf16 %v641, %v640
      %v659 = vpack.c.bf16 %v643, %v642
      %v660 = vpack.c.bf16 %v645, %v644
      %v661 = vpack.c.bf16 %v647, %v646
      %v662 = vpack.c.bf16 %v649, %v648
      %v663 = vpack.c.bf16 %v651, %v650
      %v664 = vpack.c.bf16 %v653, %v652
      %v665 = vpack.c.bf16 %v655, %v654
      %v666 = vld [vmem:[%s4] sm:$0xf]
      %v667 = vld [vmem:[%s4 + $0x4] sm:$0xf]
      %v668 = vld [vmem:[%s4 + $0x8] sm:$0xf]
      %v669 = vld [vmem:[%s4 + $0xc] sm:$0xf]
      %v670 = vld [vmem:[%s4 + $0x10] sm:$0xf]
      %v671 = vld [vmem:[%s4 + $0x14] sm:$0xf]
      %v672 = vld [vmem:[%s4 + $0x18] sm:$0xf]
      %v673 = vld [vmem:[%s4 + $0x1c] sm:$0xf]
      %v674 = vld [vmem:[%s4 + $0x20] sm:$0xf]
      %v675 = vld [vmem:[%s4 + $0x24] sm:$0xf]
      %v676 = vld [vmem:[%s4 + $0x28] sm:$0xf]
      %v677 = vld [vmem:[%s4 + $0x2c] sm:$0xf]
      %v678 = vld [vmem:[%s4 + $0x30] sm:$0xf]
      %v679 = vld [vmem:[%s4 + $0x34] sm:$0xf]
      %v680 = vld [vmem:[%s4 + $0x38] sm:$0xf]
      %v681 = vld [vmem:[%s4 + $0x3c] sm:$0xf]
      %v690 = vunpack.c.l.b16 %v656
      %v691 = vunpack.c.h.b16 %v656
      %v692 = vunpack.c.l.b16 %v657
      %v693 = vunpack.c.h.b16 %v657
      %v694 = vunpack.c.l.b16 %v658
      %v695 = vunpack.c.h.b16 %v658
      %v696 = vunpack.c.l.b16 %v659
      %v697 = vunpack.c.h.b16 %v659
      %v698 = vunpack.c.l.b16 %v660
      %v699 = vunpack.c.h.b16 %v660
      %v700 = vunpack.c.l.b16 %v661
      %v701 = vunpack.c.h.b16 %v661
      %v702 = vunpack.c.l.b16 %v662
      %v703 = vunpack.c.h.b16 %v662
      %v704 = vunpack.c.l.b16 %v663
      %v705 = vunpack.c.h.b16 %v663
      %v706 = vpack.c.b16 %v690, %v690
      %v707 = vpack.c.b16 %v691, %v691
      %v708 = vpack.c.b16 %v692, %v692
      %v709 = vpack.c.b16 %v693, %v693
      %v710 = vpack.c.b16 %v694, %v694
      %v711 = vpack.c.b16 %v695, %v695
      %v712 = vpack.c.b16 %v696, %v696
      %v713 = vpack.c.b16 %v697, %v697
      %v714 = vpack.c.b16 %v698, %v698
      %v715 = vpack.c.b16 %v699, %v699
      %v716 = vpack.c.b16 %v700, %v700
      %v717 = vpack.c.b16 %v701, %v701
      %v718 = vpack.c.b16 %v702, %v702
      %v719 = vpack.c.b16 %v703, %v703
      %v720 = vpack.c.b16 %v704, %v704
      %v721 = vpack.c.b16 %v705, %v705
      %vm722 = vsmask.f32 3328
      %vm723 = vsmask.f32 7440
      %vm724 = vmor %vm722, %vm723
      %v726 = vshrl.u32 %v706, 16
      %v728 = vrot.slane %v726, 4
      %v729 = vshll.u32 %v706, 16
      %v731 = vrot.slane %v729, 5
      %v732 = vor.u32 %v728, %v731
      %v733 = vrot.slane %v732, 4
      %v735 = vshll.u32 %v707, 16
      %v737 = vrot.slane %v735, 5
      %v738 = vsel %vm724, %v733, %v737
      %v740 = vshrl.u32 %v708, 16
      %v742 = vrot.slane %v740, 4
      %v743 = vshll.u32 %v708, 16
      %v745 = vrot.slane %v743, 5
      %v746 = vor.u32 %v742, %v745
      %v747 = vrot.slane %v746, 4
      %v749 = vshll.u32 %v709, 16
      %v751 = vrot.slane %v749, 5
      %v752 = vsel %vm724, %v747, %v751
      %v754 = vshrl.u32 %v710, 16
      %v756 = vrot.slane %v754, 4
      %v757 = vshll.u32 %v710, 16
      %v759 = vrot.slane %v757, 5
      %v760 = vor.u32 %v756, %v759
      %v761 = vrot.slane %v760, 4
      %v763 = vshll.u32 %v711, 16
      %v765 = vrot.slane %v763, 5
      %v766 = vsel %vm724, %v761, %v765
      %v768 = vshrl.u32 %v712, 16
      %v770 = vrot.slane %v768, 4
      %v771 = vshll.u32 %v712, 16
      %v773 = vrot.slane %v771, 5
      %v774 = vor.u32 %v770, %v773
      %v775 = vrot.slane %v774, 4
      %v777 = vshll.u32 %v713, 16
      %v779 = vrot.slane %v777, 5
      %v780 = vsel %vm724, %v775, %v779
      %v782 = vshrl.u32 %v714, 16
      %v784 = vrot.slane %v782, 4
      %v785 = vshll.u32 %v714, 16
      %v787 = vrot.slane %v785, 5
      %v788 = vor.u32 %v784, %v787
      %v789 = vrot.slane %v788, 4
      %v791 = vshll.u32 %v715, 16
      %v793 = vrot.slane %v791, 5
      %v794 = vsel %vm724, %v789, %v793
      %v796 = vshrl.u32 %v716, 16
      %v798 = vrot.slane %v796, 4
      %v799 = vshll.u32 %v716, 16
      %v801 = vrot.slane %v799, 5
      %v802 = vor.u32 %v798, %v801
      %v803 = vrot.slane %v802, 4
      %v805 = vshll.u32 %v717, 16
      %v807 = vrot.slane %v805, 5
      %v808 = vsel %vm724, %v803, %v807
      %v810 = vshrl.u32 %v718, 16
      %v812 = vrot.slane %v810, 4
      %v813 = vshll.u32 %v718, 16
      %v815 = vrot.slane %v813, 5
      %v816 = vor.u32 %v812, %v815
      %v817 = vrot.slane %v816, 4
      %v819 = vshll.u32 %v719, 16
      %v821 = vrot.slane %v819, 5
      %v822 = vsel %vm724, %v817, %v821
      %v824 = vshrl.u32 %v720, 16
      %v826 = vrot.slane %v824, 4
      %v827 = vshll.u32 %v720, 16
      %v829 = vrot.slane %v827, 5
      %v830 = vor.u32 %v826, %v829
      %v831 = vrot.slane %v830, 4
      %v833 = vshll.u32 %v721, 16
      %v835 = vrot.slane %v833, 5
      %v836 = vsel %vm724, %v831, %v835
      %s837 = scalar_lea.vmem %s4, 64
      %v838 = vld [vmem:[%s837] sm:$0xf]
      %v839 = vld [vmem:[%s837 + $0x4] sm:$0xf]
      %v840 = vld [vmem:[%s837 + $0x8] sm:$0xf]
      %v841 = vld [vmem:[%s837 + $0xc] sm:$0xf]
      %v842 = vld [vmem:[%s837 + $0x10] sm:$0xf]
      %v843 = vld [vmem:[%s837 + $0x14] sm:$0xf]
      %v844 = vld [vmem:[%s837 + $0x18] sm:$0xf]
      %v845 = vld [vmem:[%s837 + $0x1c] sm:$0xf]
      %v846 = vld [vmem:[%s837 + $0x20] sm:$0xf]
      %v847 = vld [vmem:[%s837 + $0x24] sm:$0xf]
      %v848 = vld [vmem:[%s837 + $0x28] sm:$0xf]
      %v849 = vld [vmem:[%s837 + $0x2c] sm:$0xf]
      %v850 = vld [vmem:[%s837 + $0x30] sm:$0xf]
      %v851 = vld [vmem:[%s837 + $0x34] sm:$0xf]
      %v852 = vld [vmem:[%s837 + $0x38] sm:$0xf]
      %v853 = vld [vmem:[%s837 + $0x3c] sm:$0xf]
      %v854 = vunpack.c.l.b16 %v738
      %v855 = vunpack.c.l.b16 %v752
      %v856 = vunpack.c.l.b16 %v766
      %v857 = vunpack.c.l.b16 %v780
      %v858 = vunpack.c.l.b16 %v794
      %v859 = vunpack.c.l.b16 %v808
      %v860 = vunpack.c.l.b16 %v822
      %v861 = vunpack.c.l.b16 %v836
      %v862 = vpack.c.b16 %v855, %v854
      %v863 = vpack.c.b16 %v857, %v856
      %v864 = vpack.c.b16 %v859, %v858
      %v865 = vpack.c.b16 %v861, %v860
      %v886 = vunpack.c.l.b16 %v838
      %v887 = vunpack.c.l.b16 %v839
      %v888 = vunpack.c.l.b16 %v840
      %v889 = vunpack.c.l.b16 %v841
      %v890 = vunpack.c.l.b16 %v842
      %v891 = vunpack.c.l.b16 %v843
      %v892 = vunpack.c.l.b16 %v844
      %v893 = vunpack.c.l.b16 %v845
      %v894 = vunpack.c.l.b16 %v846
      %v895 = vunpack.c.l.b16 %v847
      %v896 = vunpack.c.l.b16 %v848
      %v897 = vunpack.c.l.b16 %v849
      %v898 = vunpack.c.l.b16 %v850
      %v899 = vunpack.c.l.b16 %v851
      %v900 = vunpack.c.l.b16 %v852
      %v901 = vunpack.c.l.b16 %v853
      %v902 = vpack.c.b16 %v887, %v886
      %v903 = vpack.c.b16 %v889, %v888
      %v904 = vpack.c.b16 %v891, %v890
      %v905 = vpack.c.b16 %v893, %v892
      %v906 = vpack.c.b16 %v895, %v894
      %v907 = vpack.c.b16 %v897, %v896
      %v908 = vpack.c.b16 %v899, %v898
      %v909 = vpack.c.b16 %v901, %v900
      %918 = vmatprep.subr.bf16.mxu0 0
      %919 = vmatpush1.bf16.msra.mxu0 %v902
      %920 = vmatprep.subr.bf16.mxu0 0
      %921 = vmatpush1.bf16.msra.mxu0 %v903
      %922 = vmatprep.subr.bf16.mxu0 0
      %923 = vmatpush1.bf16.msra.mxu0 %v904
      %924 = vmatprep.subr.bf16.mxu0 0
      %925 = vmatpush1.bf16.msra.mxu0 %v905
      %926 = vmatprep.subr.bf16.mxu0 0
      %927 = vmatpush1.bf16.msra.mxu0 %v906
      %928 = vmatprep.subr.bf16.mxu0 0
      %929 = vmatpush1.bf16.msra.mxu0 %v907
      %930 = vmatprep.subr.bf16.mxu0 0
      %931 = vmatpush1.bf16.msra.mxu0 %v908
      %932 = vmatprep.subr.bf16.mxu0 0
      %933 = vmatpush1.bf16.msra.mxu0 %v909
      %934 = vmatprep.subr.bf16.mxu0 0
      %935 = vmatpush1.bf16.msra.mxu0 0
      %936 = vmatprep.subr.bf16.mxu0 0
      %937 = vmatpush1.bf16.msra.mxu0 0
      %938 = vmatprep.subr.bf16.mxu0 0
      %939 = vmatpush1.bf16.msra.mxu0 0
      %940 = vmatprep.subr.bf16.mxu0 0
      %941 = vmatpush1.bf16.msra.mxu0 0
      %942 = vmatprep.subr.bf16.mxu0 0
      %943 = vmatpush1.bf16.msra.mxu0 0
      %944 = vmatprep.subr.bf16.mxu0 0
      %945 = vmatpush1.bf16.msra.mxu0 0
      %946 = vmatprep.subr.bf16.mxu0 0
      %947 = vmatpush1.bf16.msra.mxu0 0
      %948 = vmatprep.subr.bf16.mxu0 0
      %949 = vmatpush1.bf16.msra.mxu0 0
      %950 = vmatprep.mubr.bf16.mxu0 0
      %951 = vmatmul.mubr.bf16.gmra.mrb[0].mxu0 %v862
      %v952 = vpop.f32.mrb[0].mxu0
      %v953 = vadd.f32 0.0, %v952
      %v954 = vpop.f32.mrb[0].mxu0
      %v955 = vpop.f32.mrb[0].mxu0
      %v956 = vadd.f32 0.0, %v955
      %v957 = vpop.f32.mrb[0].mxu0
      %958 = vmatprep.mubr.bf16.mxu0 0
      %959 = vmatmul.mubr.bf16.gmra.mrb[0].mxu0 %v863
      %v960 = vpop.f32.mrb[0].mxu0
      %v961 = vadd.f32 0.0, %v960
      %v962 = vpop.f32.mrb[0].mxu0
      %v963 = vpop.f32.mrb[0].mxu0
      %v964 = vadd.f32 0.0, %v963
      %v965 = vpop.f32.mrb[0].mxu0
      %966 = vmatprep.mubr.bf16.mxu0 0
      %967 = vmatmul.mubr.bf16.gmra.mrb[0].mxu0 %v864
      %v968 = vpop.f32.mrb[0].mxu0
      %v969 = vadd.f32 0.0, %v968
      %v970 = vpop.f32.mrb[0].mxu0
      %v971 = vpop.f32.mrb[0].mxu0
      %v972 = vadd.f32 0.0, %v971
      %v973 = vpop.f32.mrb[0].mxu0
      %974 = vmatprep.mubr.bf16.mxu0 0
      %975 = vmatmul.mubr.bf16.gmra.mrb[0].mxu0 %v865
      %v976 = vpop.f32.mrb[0].mxu0
      %v977 = vadd.f32 0.0, %v976
      %v978 = vpop.f32.mrb[0].mxu0
      %v979 = vpop.f32.mrb[0].mxu0
      %v980 = vadd.f32 0.0, %v979
      %v981 = vpop.f32.mrb[0].mxu0
      %982 = vdwg.mxu0
      %v983 = vpack.c.b16 %v692, %v690
      %v984 = vpack.c.b16 %v696, %v694
      %v985 = vpack.c.b16 %v700, %v698
      %v986 = vpack.c.b16 %v704, %v702
      %v1007 = vunpack.c.l.b16 %v666
      %v1008 = vunpack.c.l.b16 %v667
      %v1009 = vunpack.c.l.b16 %v668
      %v1010 = vunpack.c.l.b16 %v669
      %v1011 = vunpack.c.l.b16 %v670
      %v1012 = vunpack.c.l.b16 %v671
      %v1013 = vunpack.c.l.b16 %v672
      %v1014 = vunpack.c.l.b16 %v673
      %v1015 = vunpack.c.l.b16 %v674
      %v1016 = vunpack.c.l.b16 %v675
      %v1017 = vunpack.c.l.b16 %v676
      %v1018 = vunpack.c.l.b16 %v677
      %v1019 = vunpack.c.l.b16 %v678
      %v1020 = vunpack.c.l.b16 %v679
      %v1021 = vunpack.c.l.b16 %v680
      %v1022 = vunpack.c.l.b16 %v681
      %v1023 = vpack.c.b16 %v1008, %v1007
      %v1024 = vpack.c.b16 %v1010, %v1009
      %v1025 = vpack.c.b16 %v1012, %v1011
      %v1026 = vpack.c.b16 %v1014, %v1013
      %v1027 = vpack.c.b16 %v1016, %v1015
      %v1028 = vpack.c.b16 %v1018, %v1017
      %v1029 = vpack.c.b16 %v1020, %v1019
      %v1030 = vpack.c.b16 %v1022, %v1021
      %1039 = vmatprep.subr.bf16.mxu0 0
      %1040 = vmatpush1.bf16.msra.mxu0 %v1023
      %1041 = vmatprep.subr.bf16.mxu0 0
      %1042 = vmatpush1.bf16.msra.mxu0 %v1024
      %1043 = vmatprep.subr.bf16.mxu0 0
      %1044 = vmatpush1.bf16.msra.mxu0 %v1025
      %1045 = vmatprep.subr.bf16.mxu0 0
      %1046 = vmatpush1.bf16.msra.mxu0 %v1026
      %1047 = vmatprep.subr.bf16.mxu0 0
      %1048 = vmatpush1.bf16.msra.mxu0 %v1027
      %1049 = vmatprep.subr.bf16.mxu0 0
      %1050 = vmatpush1.bf16.msra.mxu0 %v1028
      %1051 = vmatprep.subr.bf16.mxu0 0
      %1052 = vmatpush1.bf16.msra.mxu0 %v1029
      %1053 = vmatprep.subr.bf16.mxu0 0
      %1054 = vmatpush1.bf16.msra.mxu0 %v1030
      %1055 = vmatprep.subr.bf16.mxu0 0
      %1056 = vmatpush1.bf16.msra.mxu0 0
      %1057 = vmatprep.subr.bf16.mxu0 0
      %1058 = vmatpush1.bf16.msra.mxu0 0
      %1059 = vmatprep.subr.bf16.mxu0 0
      %1060 = vmatpush1.bf16.msra.mxu0 0
      %1061 = vmatprep.subr.bf16.mxu0 0
      %1062 = vmatpush1.bf16.msra.mxu0 0
      %1063 = vmatprep.subr.bf16.mxu0 0
      %1064 = vmatpush1.bf16.msra.mxu0 0
      %1065 = vmatprep.subr.bf16.mxu0 0
      %1066 = vmatpush1.bf16.msra.mxu0 0
      %1067 = vmatprep.subr.bf16.mxu0 0
      %1068 = vmatpush1.bf16.msra.mxu0 0
      %1069 = vmatprep.subr.bf16.mxu0 0
      %1070 = vmatpush1.bf16.msra.mxu0 0
      %1071 = vmatprep.mubr.bf16.mxu0 0
      %1072 = vmatmul.mubr.bf16.gmra.mrb[0].mxu0 %v983
      %v1073 = vpop.f32.mrb[0].mxu0
      %v1074 = vadd.f32 %v953, %v1073
      %v1075 = vpop.f32.mrb[0].mxu0
      %v1076 = vpop.f32.mrb[0].mxu0
      %v1077 = vadd.f32 %v956, %v1076
      %v1078 = vpop.f32.mrb[0].mxu0
      %1079 = vmatprep.mubr.bf16.mxu0 0
      %1080 = vmatmul.mubr.bf16.gmra.mrb[0].mxu0 %v984
      %v1081 = vpop.f32.mrb[0].mxu0
      %v1082 = vadd.f32 %v961, %v1081
      %v1083 = vpop.f32.mrb[0].mxu0
      %v1084 = vpop.f32.mrb[0].mxu0
      %v1085 = vadd.f32 %v964, %v1084
      %v1086 = vpop.f32.mrb[0].mxu0
      %1087 = vmatprep.mubr.bf16.mxu0 0
      %1088 = vmatmul.mubr.bf16.gmra.mrb[0].mxu0 %v985
      %v1089 = vpop.f32.mrb[0].mxu0
      %v1090 = vadd.f32 %v969, %v1089
      %v1091 = vpop.f32.mrb[0].mxu0
      %v1092 = vpop.f32.mrb[0].mxu0
      %v1093 = vadd.f32 %v972, %v1092
      %v1094 = vpop.f32.mrb[0].mxu0
      %1095 = vmatprep.mubr.bf16.mxu0 0
      %1096 = vmatmul.mubr.bf16.gmra.mrb[0].mxu0 %v986
      %v1097 = vpop.f32.mrb[0].mxu0
      %v1098 = vadd.f32 %v977, %v1097
      %v1099 = vpop.f32.mrb[0].mxu0
      %v1100 = vpop.f32.mrb[0].mxu0
      %v1101 = vadd.f32 %v980, %v1100
      %v1102 = vpop.f32.mrb[0].mxu0
      %1103 = vdwg.mxu0
      %vm1104 = vcmask 1042432
      %vm1105 = vcmask 1046532
      %vm1106 = vmor %vm1104, %vm1105
      %v1107 = vrot.slane %v706, 5
      %v1108 = vrot.slane %v1107, 4
      %v1109 = vrot.slane %v707, 5
      %v1110 = vsel %vm1106, %v1108, %v1109
      %v1111 = vrot.slane %v708, 5
      %v1112 = vrot.slane %v1111, 4
      %v1113 = vrot.slane %v709, 5
      %v1114 = vsel %vm1106, %v1112, %v1113
      %v1115 = vrot.slane %v710, 5
      %v1116 = vrot.slane %v1115, 4
      %v1117 = vrot.slane %v711, 5
      %v1118 = vsel %vm1106, %v1116, %v1117
      %v1119 = vrot.slane %v712, 5
      %v1120 = vrot.slane %v1119, 4
      %v1121 = vrot.slane %v713, 5
      %v1122 = vsel %vm1106, %v1120, %v1121
      %v1123 = vrot.slane %v714, 5
      %v1124 = vrot.slane %v1123, 4
      %v1125 = vrot.slane %v715, 5
      %v1126 = vsel %vm1106, %v1124, %v1125
      %v1127 = vrot.slane %v716, 5
      %v1128 = vrot.slane %v1127, 4
      %v1129 = vrot.slane %v717, 5
      %v1130 = vsel %vm1106, %v1128, %v1129
      %v1131 = vrot.slane %v718, 5
      %v1132 = vrot.slane %v1131, 4
      %v1133 = vrot.slane %v719, 5
      %v1134 = vsel %vm1106, %v1132, %v1133
      %v1135 = vrot.slane %v720, 5
      %v1136 = vrot.slane %v1135, 4
      %v1137 = vrot.slane %v721, 5
      %v1138 = vsel %vm1106, %v1136, %v1137
      %s1139 = scalar_lea.vmem %s4, 128
      %v1140 = vld [vmem:[%s1139] sm:$0xf]
      %v1141 = vld [vmem:[%s1139 + $0x4] sm:$0xf]
      %v1142 = vld [vmem:[%s1139 + $0x8] sm:$0xf]
      %v1143 = vld [vmem:[%s1139 + $0xc] sm:$0xf]
      %v1144 = vld [vmem:[%s1139 + $0x10] sm:$0xf]
      %v1145 = vld [vmem:[%s1139 + $0x14] sm:$0xf]
      %v1146 = vld [vmem:[%s1139 + $0x18] sm:$0xf]
      %v1147 = vld [vmem:[%s1139 + $0x1c] sm:$0xf]
      %v1148 = vld [vmem:[%s1139 + $0x20] sm:$0xf]
      %v1149 = vld [vmem:[%s1139 + $0x24] sm:$0xf]
      %v1150 = vld [vmem:[%s1139 + $0x28] sm:$0xf]
      %v1151 = vld [vmem:[%s1139 + $0x2c] sm:$0xf]
      %v1152 = vld [vmem:[%s1139 + $0x30] sm:$0xf]
      %v1153 = vld [vmem:[%s1139 + $0x34] sm:$0xf]
      %v1154 = vld [vmem:[%s1139 + $0x38] sm:$0xf]
      %v1155 = vld [vmem:[%s1139 + $0x3c] sm:$0xf]
      %v1156 = vunpack.c.l.b16 %v1110
      %v1157 = vunpack.c.l.b16 %v1114
      %v1158 = vunpack.c.l.b16 %v1118
      %v1159 = vunpack.c.l.b16 %v1122
      %v1160 = vunpack.c.l.b16 %v1126
      %v1161 = vunpack.c.l.b16 %v1130
      %v1162 = vunpack.c.l.b16 %v1134
      %v1163 = vunpack.c.l.b16 %v1138
      %v1164 = vpack.c.b16 %v1157, %v1156
      %v1165 = vpack.c.b16 %v1159, %v1158
      %v1166 = vpack.c.b16 %v1161, %v1160
      %v1167 = vpack.c.b16 %v1163, %v1162
      %v1188 = vunpack.c.l.b16 %v1140
      %v1189 = vunpack.c.l.b16 %v1141
      %v1190 = vunpack.c.l.b16 %v1142
      %v1191 = vunpack.c.l.b16 %v1143
      %v1192 = vunpack.c.l.b16 %v1144
      %v1193 = vunpack.c.l.b16 %v1145
      %v1194 = vunpack.c.l.b16 %v1146
      %v1195 = vunpack.c.l.b16 %v1147
      %v1196 = vunpack.c.l.b16 %v1148
      %v1197 = vunpack.c.l.b16 %v1149
      %v1198 = vunpack.c.l.b16 %v1150
      %v1199 = vunpack.c.l.b16 %v1151
      %v1200 = vunpack.c.l.b16 %v1152
      %v1201 = vunpack.c.l.b16 %v1153
      %v1202 = vunpack.c.l.b16 %v1154
      %v1203 = vunpack.c.l.b16 %v1155
      %v1204 = vpack.c.b16 %v1189, %v1188
      %v1205 = vpack.c.b16 %v1191, %v1190
      %v1206 = vpack.c.b16 %v1193, %v1192
      %v1207 = vpack.c.b16 %v1195, %v1194
      %v1208 = vpack.c.b16 %v1197, %v1196
      %v1209 = vpack.c.b16 %v1199, %v1198
      %v1210 = vpack.c.b16 %v1201, %v1200
      %v1211 = vpack.c.b16 %v1203, %v1202
      %1220 = vmatprep.subr.bf16.mxu0 0
      %1221 = vmatpush1.bf16.msra.mxu0 %v1204
      %1222 = vmatprep.subr.bf16.mxu0 0
      %1223 = vmatpush1.bf16.msra.mxu0 %v1205
      %1224 = vmatprep.subr.bf16.mxu0 0
      %1225 = vmatpush1.bf16.msra.mxu0 %v1206
      %1226 = vmatprep.subr.bf16.mxu0 0
      %1227 = vmatpush1.bf16.msra.mxu0 %v1207
      %1228 = vmatprep.subr.bf16.mxu0 0
      %1229 = vmatpush1.bf16.msra.mxu0 %v1208
      %1230 = vmatprep.subr.bf16.mxu0 0
      %1231 = vmatpush1.bf16.msra.mxu0 %v1209
      %1232 = vmatprep.subr.bf16.mxu0 0
      %1233 = vmatpush1.bf16.msra.mxu0 %v1210
      %1234 = vmatprep.subr.bf16.mxu0 0
      %1235 = vmatpush1.bf16.msra.mxu0 %v1211
      %1236 = vmatprep.subr.bf16.mxu0 0
      %1237 = vmatpush1.bf16.msra.mxu0 0
      %1238 = vmatprep.subr.bf16.mxu0 0
      %1239 = vmatpush1.bf16.msra.mxu0 0
      %1240 = vmatprep.subr.bf16.mxu0 0
      %1241 = vmatpush1.bf16.msra.mxu0 0
      %1242 = vmatprep.subr.bf16.mxu0 0
      %1243 = vmatpush1.bf16.msra.mxu0 0
      %1244 = vmatprep.subr.bf16.mxu0 0
      %1245 = vmatpush1.bf16.msra.mxu0 0
      %1246 = vmatprep.subr.bf16.mxu0 0
      %1247 = vmatpush1.bf16.msra.mxu0 0
      %1248 = vmatprep.subr.bf16.mxu0 0
      %1249 = vmatpush1.bf16.msra.mxu0 0
      %1250 = vmatprep.subr.bf16.mxu0 0
      %1251 = vmatpush1.bf16.msra.mxu0 0
      %1252 = vmatprep.mubr.bf16.mxu0 0
      %1253 = vmatmul.mubr.bf16.gmra.mrb[0].mxu0 %v1164
      %v1254 = vpop.f32.mrb[0].mxu0
      %v1255 = vadd.f32 0.0, %v1254
      %v1256 = vpop.f32.mrb[0].mxu0
      %v1257 = vpop.f32.mrb[0].mxu0
      %v1258 = vadd.f32 0.0, %v1257
      %v1259 = vpop.f32.mrb[0].mxu0
      %1260 = vmatprep.mubr.bf16.mxu0 0
      %1261 = vmatmul.mubr.bf16.gmra.mrb[0].mxu0 %v1165
      %v1262 = vpop.f32.mrb[0].mxu0
      %v1263 = vadd.f32 0.0, %v1262
      %v1264 = vpop.f32.mrb[0].mxu0
      %v1265 = vpop.f32.mrb[0].mxu0
      %v1266 = vadd.f32 0.0, %v1265
      %v1267 = vpop.f32.mrb[0].mxu0
      %1268 = vmatprep.mubr.bf16.mxu0 0
      %1269 = vmatmul.mubr.bf16.gmra.mrb[0].mxu0 %v1166
      %v1270 = vpop.f32.mrb[0].mxu0
      %v1271 = vadd.f32 0.0, %v1270
      %v1272 = vpop.f32.mrb[0].mxu0
      %v1273 = vpop.f32.mrb[0].mxu0
      %v1274 = vadd.f32 0.0, %v1273
      %v1275 = vpop.f32.mrb[0].mxu0
      %1276 = vmatprep.mubr.bf16.mxu0 0
      %1277 = vmatmul.mubr.bf16.gmra.mrb[0].mxu0 %v1167
      %v1278 = vpop.f32.mrb[0].mxu0
      %v1279 = vadd.f32 0.0, %v1278
      %v1280 = vpop.f32.mrb[0].mxu0
      %v1281 = vpop.f32.mrb[0].mxu0
      %v1282 = vadd.f32 0.0, %v1281
      %v1283 = vpop.f32.mrb[0].mxu0
      %1284 = vdwg.mxu0
      %v1285 = vadd.f32 %v1074, %v1255
      %v1286 = vadd.f32 %v1077, %v1258
      %v1287 = vadd.f32 %v1082, %v1263
      %v1288 = vadd.f32 %v1085, %v1266
      %v1289 = vadd.f32 %v1090, %v1271
      %v1290 = vadd.f32 %v1093, %v1274
      %v1291 = vadd.f32 %v1098, %v1279
      %v1292 = vadd.f32 %v1101, %v1282
      %s1293 = scalar_lea.vmem %s4, 192
      %v1294 = vld [vmem:[%s1293] sm:$0xf]
      %v1295 = vld [vmem:[%s1293 + $0x4] sm:$0xf]
      %v1296 = vld [vmem:[%s1293 + $0x8] sm:$0xf]
      %v1297 = vld [vmem:[%s1293 + $0xc] sm:$0xf]
      %v1298 = vld [vmem:[%s1293 + $0x10] sm:$0xf]
      %v1299 = vld [vmem:[%s1293 + $0x14] sm:$0xf]
      %v1300 = vld [vmem:[%s1293 + $0x18] sm:$0xf]
      %v1301 = vld [vmem:[%s1293 + $0x1c] sm:$0xf]
      %v1302 = vld [vmem:[%s1293 + $0x20] sm:$0xf]
      %v1303 = vld [vmem:[%s1293 + $0x24] sm:$0xf]
      %v1304 = vld [vmem:[%s1293 + $0x28] sm:$0xf]
      %v1305 = vld [vmem:[%s1293 + $0x2c] sm:$0xf]
      %v1306 = vld [vmem:[%s1293 + $0x30] sm:$0xf]
      %v1307 = vld [vmem:[%s1293 + $0x34] sm:$0xf]
      %v1308 = vld [vmem:[%s1293 + $0x38] sm:$0xf]
      %v1309 = vld [vmem:[%s1293 + $0x3c] sm:$0xf]
      %v1311 = vunpack.c.l.b16 %v664
      %v1312 = vpack.c.b16 %v694, %v692
      %v1313 = vpack.c.b16 %v698, %v696
      %v1314 = vpack.c.b16 %v702, %v700
      %v1315 = vpack.c.b16 %v1311, %v704
      %v1336 = vunpack.c.l.b16 %v1294
      %v1337 = vunpack.c.l.b16 %v1295
      %v1338 = vunpack.c.l.b16 %v1296
      %v1339 = vunpack.c.l.b16 %v1297
      %v1340 = vunpack.c.l.b16 %v1298
      %v1341 = vunpack.c.l.b16 %v1299
      %v1342 = vunpack.c.l.b16 %v1300
      %v1343 = vunpack.c.l.b16 %v1301
      %v1344 = vunpack.c.l.b16 %v1302
      %v1345 = vunpack.c.l.b16 %v1303
      %v1346 = vunpack.c.l.b16 %v1304
      %v1347 = vunpack.c.l.b16 %v1305
      %v1348 = vunpack.c.l.b16 %v1306
      %v1349 = vunpack.c.l.b16 %v1307
      %v1350 = vunpack.c.l.b16 %v1308
      %v1351 = vunpack.c.l.b16 %v1309
      %v1352 = vpack.c.b16 %v1337, %v1336
      %v1353 = vpack.c.b16 %v1339, %v1338
      %v1354 = vpack.c.b16 %v1341, %v1340
      %v1355 = vpack.c.b16 %v1343, %v1342
      %v1356 = vpack.c.b16 %v1345, %v1344
      %v1357 = vpack.c.b16 %v1347, %v1346
      %v1358 = vpack.c.b16 %v1349, %v1348
      %v1359 = vpack.c.b16 %v1351, %v1350
      %1368 = vmatprep.subr.bf16.mxu0 0
      %1369 = vmatpush1.bf16.msra.mxu0 %v1352
      %1370 = vmatprep.subr.bf16.mxu0 0
      %1371 = vmatpush1.bf16.msra.mxu0 %v1353
      %1372 = vmatprep.subr.bf16.mxu0 0
      %1373 = vmatpush1.bf16.msra.mxu0 %v1354
      %1374 = vmatprep.subr.bf16.mxu0 0
      %1375 = vmatpush1.bf16.msra.mxu0 %v1355
      %1376 = vmatprep.subr.bf16.mxu0 0
      %1377 = vmatpush1.bf16.msra.mxu0 %v1356
      %1378 = vmatprep.subr.bf16.mxu0 0
      %1379 = vmatpush1.bf16.msra.mxu0 %v1357
      %1380 = vmatprep.subr.bf16.mxu0 0
      %1381 = vmatpush1.bf16.msra.mxu0 %v1358
      %1382 = vmatprep.subr.bf16.mxu0 0
      %1383 = vmatpush1.bf16.msra.mxu0 %v1359
      %1384 = vmatprep.subr.bf16.mxu0 0
      %1385 = vmatpush1.bf16.msra.mxu0 0
      %1386 = vmatprep.subr.bf16.mxu0 0
      %1387 = vmatpush1.bf16.msra.mxu0 0
      %1388 = vmatprep.subr.bf16.mxu0 0
      %1389 = vmatpush1.bf16.msra.mxu0 0
      %1390 = vmatprep.subr.bf16.mxu0 0
      %1391 = vmatpush1.bf16.msra.mxu0 0
      %1392 = vmatprep.subr.bf16.mxu0 0
      %1393 = vmatpush1.bf16.msra.mxu0 0
      %1394 = vmatprep.subr.bf16.mxu0 0
      %1395 = vmatpush1.bf16.msra.mxu0 0
      %1396 = vmatprep.subr.bf16.mxu0 0
      %1397 = vmatpush1.bf16.msra.mxu0 0
      %1398 = vmatprep.subr.bf16.mxu0 0
      %1399 = vmatpush1.bf16.msra.mxu0 0
      %1400 = vmatprep.mubr.bf16.mxu0 0
      %1401 = vmatmul.mubr.bf16.gmra.mrb[0].mxu0 %v1312
      %v1402 = vpop.f32.mrb[0].mxu0
      %v1403 = vadd.f32 0.0, %v1402
      %v1404 = vpop.f32.mrb[0].mxu0
      %v1405 = vpop.f32.mrb[0].mxu0
      %v1406 = vadd.f32 0.0, %v1405
      %v1407 = vpop.f32.mrb[0].mxu0
      %1408 = vmatprep.mubr.bf16.mxu0 0
      %1409 = vmatmul.mubr.bf16.gmra.mrb[0].mxu0 %v1313
      %v1410 = vpop.f32.mrb[0].mxu0
      %v1411 = vadd.f32 0.0, %v1410
      %v1412 = vpop.f32.mrb[0].mxu0
      %v1413 = vpop.f32.mrb[0].mxu0
      %v1414 = vadd.f32 0.0, %v1413
      %v1415 = vpop.f32.mrb[0].mxu0
      %1416 = vmatprep.mubr.bf16.mxu0 0
      %1417 = vmatmul.mubr.bf16.gmra.mrb[0].mxu0 %v1314
      %v1418 = vpop.f32.mrb[0].mxu0
      %v1419 = vadd.f32 0.0, %v1418
      %v1420 = vpop.f32.mrb[0].mxu0
      %v1421 = vpop.f32.mrb[0].mxu0
      %v1422 = vadd.f32 0.0, %v1421
      %v1423 = vpop.f32.mrb[0].mxu0
      %1424 = vmatprep.mubr.bf16.mxu0 0
      %1425 = vmatmul.mubr.bf16.gmra.mrb[0].mxu0 %v1315
      %v1426 = vpop.f32.mrb[0].mxu0
      %v1427 = vadd.f32 0.0, %v1426
      %v1428 = vpop.f32.mrb[0].mxu0
      %v1429 = vpop.f32.mrb[0].mxu0
      %v1430 = vadd.f32 0.0, %v1429
      %v1431 = vpop.f32.mrb[0].mxu0
      %1432 = vdwg.mxu0
      %v1433 = vadd.f32 %v1285, %v1403
      %v1434 = vadd.f32 %v1286, %v1406
      %v1435 = vadd.f32 %v1287, %v1411
      %v1436 = vadd.f32 %v1288, %v1414
      %v1437 = vadd.f32 %v1289, %v1419
      %v1438 = vadd.f32 %v1290, %v1422
      %v1439 = vadd.f32 %v1291, %v1427
      %v1440 = vadd.f32 %v1292, %v1430
      %v1441 = vunpack.c.h.b16 %v664
      %v1442 = vpack.c.b16 %v1311, %v1311
      %v1443 = vpack.c.b16 %v1441, %v1441
      %v1445 = vshrl.u32 %v1442, 16
      %v1447 = vrot.slane %v1445, 4
      %v1448 = vshll.u32 %v1442, 16
      %v1450 = vrot.slane %v1448, 5
      %v1451 = vor.u32 %v1447, %v1450
      %v1452 = vrot.slane %v1451, 4
      %v1454 = vshll.u32 %v1443, 16
      %v1456 = vrot.slane %v1454, 5
      %v1457 = vsel %vm724, %v1452, %v1456
      %s1458 = scalar_lea.vmem %s4, 256
      %v1459 = vld [vmem:[%s1458] sm:$0xf]
      %v1460 = vld [vmem:[%s1458 + $0x4] sm:$0xf]
      %v1461 = vld [vmem:[%s1458 + $0x8] sm:$0xf]
      %v1462 = vld [vmem:[%s1458 + $0xc] sm:$0xf]
      %v1463 = vld [vmem:[%s1458 + $0x10] sm:$0xf]
      %v1464 = vld [vmem:[%s1458 + $0x14] sm:$0xf]
      %v1465 = vld [vmem:[%s1458 + $0x18] sm:$0xf]
      %v1466 = vld [vmem:[%s1458 + $0x1c] sm:$0xf]
      %v1467 = vld [vmem:[%s1458 + $0x20] sm:$0xf]
      %v1468 = vld [vmem:[%s1458 + $0x24] sm:$0xf]
      %v1469 = vld [vmem:[%s1458 + $0x28] sm:$0xf]
      %v1470 = vld [vmem:[%s1458 + $0x2c] sm:$0xf]
      %v1471 = vld [vmem:[%s1458 + $0x30] sm:$0xf]
      %v1472 = vld [vmem:[%s1458 + $0x34] sm:$0xf]
      %v1473 = vld [vmem:[%s1458 + $0x38] sm:$0xf]
      %v1474 = vld [vmem:[%s1458 + $0x3c] sm:$0xf]
      %v1475 = vunpack.c.l.b16 %v1457
      %v1476 = vpack.c.b16 %v856, %v855
      %v1477 = vpack.c.b16 %v858, %v857
      %v1478 = vpack.c.b16 %v860, %v859
      %v1479 = vpack.c.b16 %v1475, %v861
      %v1500 = vunpack.c.l.b16 %v1459
      %v1501 = vunpack.c.l.b16 %v1460
      %v1502 = vunpack.c.l.b16 %v1461
      %v1503 = vunpack.c.l.b16 %v1462
      %v1504 = vunpack.c.l.b16 %v1463
      %v1505 = vunpack.c.l.b16 %v1464
      %v1506 = vunpack.c.l.b16 %v1465
      %v1507 = vunpack.c.l.b16 %v1466
      %v1508 = vunpack.c.l.b16 %v1467
      %v1509 = vunpack.c.l.b16 %v1468
      %v1510 = vunpack.c.l.b16 %v1469
      %v1511 = vunpack.c.l.b16 %v1470
      %v1512 = vunpack.c.l.b16 %v1471
      %v1513 = vunpack.c.l.b16 %v1472
      %v1514 = vunpack.c.l.b16 %v1473
      %v1515 = vunpack.c.l.b16 %v1474
      %v1516 = vpack.c.b16 %v1501, %v1500
      %v1517 = vpack.c.b16 %v1503, %v1502
      %v1518 = vpack.c.b16 %v1505, %v1504
      %v1519 = vpack.c.b16 %v1507, %v1506
      %v1520 = vpack.c.b16 %v1509, %v1508
      %v1521 = vpack.c.b16 %v1511, %v1510
      %v1522 = vpack.c.b16 %v1513, %v1512
      %v1523 = vpack.c.b16 %v1515, %v1514
      %1532 = vmatprep.subr.bf16.mxu0 0
      %1533 = vmatpush1.bf16.msra.mxu0 %v1516
      %1534 = vmatprep.subr.bf16.mxu0 0
      %1535 = vmatpush1.bf16.msra.mxu0 %v1517
      %1536 = vmatprep.subr.bf16.mxu0 0
      %1537 = vmatpush1.bf16.msra.mxu0 %v1518
      %1538 = vmatprep.subr.bf16.mxu0 0
      %1539 = vmatpush1.bf16.msra.mxu0 %v1519
      %1540 = vmatprep.subr.bf16.mxu0 0
      %1541 = vmatpush1.bf16.msra.mxu0 %v1520
      %1542 = vmatprep.subr.bf16.mxu0 0
      %1543 = vmatpush1.bf16.msra.mxu0 %v1521
      %1544 = vmatprep.subr.bf16.mxu0 0
      %1545 = vmatpush1.bf16.msra.mxu0 %v1522
      %1546 = vmatprep.subr.bf16.mxu0 0
      %1547 = vmatpush1.bf16.msra.mxu0 %v1523
      %1548 = vmatprep.subr.bf16.mxu0 0
      %1549 = vmatpush1.bf16.msra.mxu0 0
      %1550 = vmatprep.subr.bf16.mxu0 0
      %1551 = vmatpush1.bf16.msra.mxu0 0
      %1552 = vmatprep.subr.bf16.mxu0 0
      %1553 = vmatpush1.bf16.msra.mxu0 0
      %1554 = vmatprep.subr.bf16.mxu0 0
      %1555 = vmatpush1.bf16.msra.mxu0 0
      %1556 = vmatprep.subr.bf16.mxu0 0
      %1557 = vmatpush1.bf16.msra.mxu0 0
      %1558 = vmatprep.subr.bf16.mxu0 0
      %1559 = vmatpush1.bf16.msra.mxu0 0
      %1560 = vmatprep.subr.bf16.mxu0 0
      %1561 = vmatpush1.bf16.msra.mxu0 0
      %1562 = vmatprep.subr.bf16.mxu0 0
      %1563 = vmatpush1.bf16.msra.mxu0 0
      %1564 = vmatprep.mubr.bf16.mxu0 0
      %1565 = vmatmul.mubr.bf16.gmra.mrb[0].mxu0 %v1476
      %v1566 = vpop.f32.mrb[0].mxu0
      %v1567 = vadd.f32 0.0, %v1566
      %v1568 = vpop.f32.mrb[0].mxu0
      %v1569 = vpop.f32.mrb[0].mxu0
      %v1570 = vadd.f32 0.0, %v1569
      %v1571 = vpop.f32.mrb[0].mxu0
      %1572 = vmatprep.mubr.bf16.mxu0 0
      %1573 = vmatmul.mubr.bf16.gmra.mrb[0].mxu0 %v1477
      %v1574 = vpop.f32.mrb[0].mxu0
      %v1575 = vadd.f32 0.0, %v1574
      %v1576 = vpop.f32.mrb[0].mxu0
      %v1577 = vpop.f32.mrb[0].mxu0
      %v1578 = vadd.f32 0.0, %v1577
      %v1579 = vpop.f32.mrb[0].mxu0
      %1580 = vmatprep.mubr.bf16.mxu0 0
      %1581 = vmatmul.mubr.bf16.gmra.mrb[0].mxu0 %v1478
      %v1582 = vpop.f32.mrb[0].mxu0
      %v1583 = vadd.f32 0.0, %v1582
      %v1584 = vpop.f32.mrb[0].mxu0
      %v1585 = vpop.f32.mrb[0].mxu0
      %v1586 = vadd.f32 0.0, %v1585
      %v1587 = vpop.f32.mrb[0].mxu0
      %1588 = vmatprep.mubr.bf16.mxu0 0
      %1589 = vmatmul.mubr.bf16.gmra.mrb[0].mxu0 %v1479
      %v1590 = vpop.f32.mrb[0].mxu0
      %v1591 = vadd.f32 0.0, %v1590
      %v1592 = vpop.f32.mrb[0].mxu0
      %v1593 = vpop.f32.mrb[0].mxu0
      %v1594 = vadd.f32 0.0, %v1593
      %v1595 = vpop.f32.mrb[0].mxu0
      %1596 = vdwg.mxu0
      %v1597 = vadd.f32 %v1433, %v1567
      %v1598 = vadd.f32 %v1434, %v1570
      %v1599 = vadd.f32 %v1435, %v1575
      %v1600 = vadd.f32 %v1436, %v1578
      %v1601 = vadd.f32 %v1437, %v1583
      %v1602 = vadd.f32 %v1438, %v1586
      %v1603 = vadd.f32 %v1439, %v1591
      %v1604 = vadd.f32 %v1440, %v1594
      %v1605 = vrot.slane %v1442, 5
      %v1606 = vrot.slane %v1605, 4
      %v1607 = vrot.slane %v1443, 5
      %v1608 = vsel %vm1106, %v1606, %v1607
      %s1609 = scalar_lea.vmem %s4, 320
      %v1610 = vld [vmem:[%s1609] sm:$0xf]
      %v1611 = vld [vmem:[%s1609 + $0x4] sm:$0xf]
      %v1612 = vld [vmem:[%s1609 + $0x8] sm:$0xf]
      %v1613 = vld [vmem:[%s1609 + $0xc] sm:$0xf]
      %v1614 = vld [vmem:[%s1609 + $0x10] sm:$0xf]
      %v1615 = vld [vmem:[%s1609 + $0x14] sm:$0xf]
      %v1616 = vld [vmem:[%s1609 + $0x18] sm:$0xf]
      %v1617 = vld [vmem:[%s1609 + $0x1c] sm:$0xf]
      %v1618 = vld [vmem:[%s1609 + $0x20] sm:$0xf]
      %v1619 = vld [vmem:[%s1609 + $0x24] sm:$0xf]
      %v1620 = vld [vmem:[%s1609 + $0x28] sm:$0xf]
      %v1621 = vld [vmem:[%s1609 + $0x2c] sm:$0xf]
      %v1622 = vld [vmem:[%s1609 + $0x30] sm:$0xf]
      %v1623 = vld [vmem:[%s1609 + $0x34] sm:$0xf]
      %v1624 = vld [vmem:[%s1609 + $0x38] sm:$0xf]
      %v1625 = vld [vmem:[%s1609 + $0x3c] sm:$0xf]
      %v1626 = vunpack.c.l.b16 %v1608
      %v1627 = vpack.c.b16 %v1158, %v1157
      %v1628 = vpack.c.b16 %v1160, %v1159
      %v1629 = vpack.c.b16 %v1162, %v1161
      %v1630 = vpack.c.b16 %v1626, %v1163
      %v1651 = vunpack.c.l.b16 %v1610
      %v1652 = vunpack.c.l.b16 %v1611
      %v1653 = vunpack.c.l.b16 %v1612
      %v1654 = vunpack.c.l.b16 %v1613
      %v1655 = vunpack.c.l.b16 %v1614
      %v1656 = vunpack.c.l.b16 %v1615
      %v1657 = vunpack.c.l.b16 %v1616
      %v1658 = vunpack.c.l.b16 %v1617
      %v1659 = vunpack.c.l.b16 %v1618
      %v1660 = vunpack.c.l.b16 %v1619
      %v1661 = vunpack.c.l.b16 %v1620
      %v1662 = vunpack.c.l.b16 %v1621
      %v1663 = vunpack.c.l.b16 %v1622
      %v1664 = vunpack.c.l.b16 %v1623
      %v1665 = vunpack.c.l.b16 %v1624
      %v1666 = vunpack.c.l.b16 %v1625
      %v1667 = vpack.c.b16 %v1652, %v1651
      %v1668 = vpack.c.b16 %v1654, %v1653
      %v1669 = vpack.c.b16 %v1656, %v1655
      %v1670 = vpack.c.b16 %v1658, %v1657
      %v1671 = vpack.c.b16 %v1660, %v1659
      %v1672 = vpack.c.b16 %v1662, %v1661
      %v1673 = vpack.c.b16 %v1664, %v1663
      %v1674 = vpack.c.b16 %v1666, %v1665
      %1683 = vmatprep.subr.bf16.mxu0 0
      %1684 = vmatpush1.bf16.msra.mxu0 %v1667
      %1685 = vmatprep.subr.bf16.mxu0 0
      %1686 = vmatpush1.bf16.msra.mxu0 %v1668
      %1687 = vmatprep.subr.bf16.mxu0 0
      %1688 = vmatpush1.bf16.msra.mxu0 %v1669
      %1689 = vmatprep.subr.bf16.mxu0 0
      %1690 = vmatpush1.bf16.msra.mxu0 %v1670
      %1691 = vmatprep.subr.bf16.mxu0 0
      %1692 = vmatpush1.bf16.msra.mxu0 %v1671
      %1693 = vmatprep.subr.bf16.mxu0 0
      %1694 = vmatpush1.bf16.msra.mxu0 %v1672
      %1695 = vmatprep.subr.bf16.mxu0 0
      %1696 = vmatpush1.bf16.msra.mxu0 %v1673
      %1697 = vmatprep.subr.bf16.mxu0 0
      %1698 = vmatpush1.bf16.msra.mxu0 %v1674
      %1699 = vmatprep.subr.bf16.mxu0 0
      %1700 = vmatpush1.bf16.msra.mxu0 0
      %1701 = vmatprep.subr.bf16.mxu0 0
      %1702 = vmatpush1.bf16.msra.mxu0 0
      %1703 = vmatprep.subr.bf16.mxu0 0
      %1704 = vmatpush1.bf16.msra.mxu0 0
      %1705 = vmatprep.subr.bf16.mxu0 0
      %1706 = vmatpush1.bf16.msra.mxu0 0
      %1707 = vmatprep.subr.bf16.mxu0 0
      %1708 = vmatpush1.bf16.msra.mxu0 0
      %1709 = vmatprep.subr.bf16.mxu0 0
      %1710 = vmatpush1.bf16.msra.mxu0 0
      %1711 = vmatprep.subr.bf16.mxu0 0
      %1712 = vmatpush1.bf16.msra.mxu0 0
      %1713 = vmatprep.subr.bf16.mxu0 0
      %1714 = vmatpush1.bf16.msra.mxu0 0
      %1715 = vmatprep.mubr.bf16.mxu0 0
      %1716 = vmatmul.mubr.bf16.gmra.mrb[0].mxu0 %v1627
      %v1717 = vpop.f32.mrb[0].mxu0
      %v1718 = vadd.f32 0.0, %v1717
      %v1719 = vpop.f32.mrb[0].mxu0
      %v1720 = vpop.f32.mrb[0].mxu0
      %v1721 = vadd.f32 0.0, %v1720
      %v1722 = vpop.f32.mrb[0].mxu0
      %1723 = vmatprep.mubr.bf16.mxu0 0
      %1724 = vmatmul.mubr.bf16.gmra.mrb[0].mxu0 %v1628
      %v1725 = vpop.f32.mrb[0].mxu0
      %v1726 = vadd.f32 0.0, %v1725
      %v1727 = vpop.f32.mrb[0].mxu0
      %v1728 = vpop.f32.mrb[0].mxu0
      %v1729 = vadd.f32 0.0, %v1728
      %v1730 = vpop.f32.mrb[0].mxu0
      %1731 = vmatprep.mubr.bf16.mxu0 0
      %1732 = vmatmul.mubr.bf16.gmra.mrb[0].mxu0 %v1629
      %v1733 = vpop.f32.mrb[0].mxu0
      %v1734 = vadd.f32 0.0, %v1733
      %v1735 = vpop.f32.mrb[0].mxu0
      %v1736 = vpop.f32.mrb[0].mxu0
      %v1737 = vadd.f32 0.0, %v1736
      %v1738 = vpop.f32.mrb[0].mxu0
      %1739 = vmatprep.mubr.bf16.mxu0 0
      %1740 = vmatmul.mubr.bf16.gmra.mrb[0].mxu0 %v1630
      %v1741 = vpop.f32.mrb[0].mxu0
      %v1742 = vadd.f32 0.0, %v1741
      %v1743 = vpop.f32.mrb[0].mxu0
      %v1744 = vpop.f32.mrb[0].mxu0
      %v1745 = vadd.f32 0.0, %v1744
      %v1746 = vpop.f32.mrb[0].mxu0
      %1747 = vdwg.mxu0
      %v1748 = vadd.f32 %v1597, %v1718
      %v1749 = vadd.f32 %v1598, %v1721
      %v1750 = vadd.f32 %v1599, %v1726
      %v1751 = vadd.f32 %v1600, %v1729
      %v1752 = vadd.f32 %v1601, %v1734
      %v1753 = vadd.f32 %v1602, %v1737
      %v1754 = vadd.f32 %v1603, %v1742
      %v1755 = vadd.f32 %v1604, %v1745
      %s1756 = scalar_lea.vmem %s4, 384
      %v1757 = vld [vmem:[%s1756] sm:$0xf]
      %v1758 = vld [vmem:[%s1756 + $0x4] sm:$0xf]
      %v1759 = vld [vmem:[%s1756 + $0x8] sm:$0xf]
      %v1760 = vld [vmem:[%s1756 + $0xc] sm:$0xf]
      %v1761 = vld [vmem:[%s1756 + $0x10] sm:$0xf]
      %v1762 = vld [vmem:[%s1756 + $0x14] sm:$0xf]
      %v1763 = vld [vmem:[%s1756 + $0x18] sm:$0xf]
      %v1764 = vld [vmem:[%s1756 + $0x1c] sm:$0xf]
      %v1765 = vld [vmem:[%s1756 + $0x20] sm:$0xf]
      %v1766 = vld [vmem:[%s1756 + $0x24] sm:$0xf]
      %v1767 = vld [vmem:[%s1756 + $0x28] sm:$0xf]
      %v1768 = vld [vmem:[%s1756 + $0x2c] sm:$0xf]
      %v1769 = vld [vmem:[%s1756 + $0x30] sm:$0xf]
      %v1770 = vld [vmem:[%s1756 + $0x34] sm:$0xf]
      %v1771 = vld [vmem:[%s1756 + $0x38] sm:$0xf]
      %v1772 = vld [vmem:[%s1756 + $0x3c] sm:$0xf]
      %v1774 = vunpack.c.l.b16 %v665
      %v1775 = vpack.c.b16 %v1774, %v1311
      %v1793 = vunpack.c.l.b16 %v1757
      %v1794 = vunpack.c.l.b16 %v1758
      %v1795 = vunpack.c.l.b16 %v1759
      %v1796 = vunpack.c.l.b16 %v1760
      %v1797 = vunpack.c.l.b16 %v1761
      %v1798 = vunpack.c.l.b16 %v1762
      %v1799 = vunpack.c.l.b16 %v1763
      %v1800 = vunpack.c.l.b16 %v1764
      %v1801 = vunpack.c.l.b16 %v1765
      %v1802 = vunpack.c.l.b16 %v1766
      %v1803 = vunpack.c.l.b16 %v1767
      %v1804 = vunpack.c.l.b16 %v1768
      %v1805 = vunpack.c.l.b16 %v1769
      %v1806 = vunpack.c.l.b16 %v1770
      %v1807 = vunpack.c.l.b16 %v1771
      %v1808 = vunpack.c.l.b16 %v1772
      %v1809 = vpack.c.b16 %v1794, %v1793
      %v1810 = vpack.c.b16 %v1796, %v1795
      %v1811 = vpack.c.b16 %v1798, %v1797
      %v1812 = vpack.c.b16 %v1800, %v1799
      %v1813 = vpack.c.b16 %v1802, %v1801
      %v1814 = vpack.c.b16 %v1804, %v1803
      %v1815 = vpack.c.b16 %v1806, %v1805
      %v1816 = vpack.c.b16 %v1808, %v1807
      %1825 = vmatprep.subr.bf16.mxu0 0
      %1826 = vmatpush1.bf16.msra.mxu0 %v1809
      %1827 = vmatprep.subr.bf16.mxu0 0
      %1828 = vmatpush1.bf16.msra.mxu0 %v1810
      %1829 = vmatprep.subr.bf16.mxu0 0
      %1830 = vmatpush1.bf16.msra.mxu0 %v1811
      %1831 = vmatprep.subr.bf16.mxu0 0
      %1832 = vmatpush1.bf16.msra.mxu0 %v1812
      %1833 = vmatprep.subr.bf16.mxu0 0
      %1834 = vmatpush1.bf16.msra.mxu0 %v1813
      %1835 = vmatprep.subr.bf16.mxu0 0
      %1836 = vmatpush1.bf16.msra.mxu0 %v1814
      %1837 = vmatprep.subr.bf16.mxu0 0
      %1838 = vmatpush1.bf16.msra.mxu0 %v1815
      %1839 = vmatprep.subr.bf16.mxu0 0
      %1840 = vmatpush1.bf16.msra.mxu0 %v1816
      %1841 = vmatprep.subr.bf16.mxu0 0
      %1842 = vmatpush1.bf16.msra.mxu0 0
      %1843 = vmatprep.subr.bf16.mxu0 0
      %1844 = vmatpush1.bf16.msra.mxu0 0
      %1845 = vmatprep.subr.bf16.mxu0 0
      %1846 = vmatpush1.bf16.msra.mxu0 0
      %1847 = vmatprep.subr.bf16.mxu0 0
      %1848 = vmatpush1.bf16.msra.mxu0 0
      %1849 = vmatprep.subr.bf16.mxu0 0
      %1850 = vmatpush1.bf16.msra.mxu0 0
      %1851 = vmatprep.subr.bf16.mxu0 0
      %1852 = vmatpush1.bf16.msra.mxu0 0
      %1853 = vmatprep.subr.bf16.mxu0 0
      %1854 = vmatpush1.bf16.msra.mxu0 0
      %1855 = vmatprep.subr.bf16.mxu0 0
      %1856 = vmatpush1.bf16.msra.mxu0 0
      %1857 = vmatprep.mubr.bf16.mxu0 0
      %1858 = vmatmul.mubr.bf16.gmra.mrb[0].mxu0 %v984
      %v1859 = vpop.f32.mrb[0].mxu0
      %v1860 = vadd.f32 0.0, %v1859
      %v1861 = vpop.f32.mrb[0].mxu0
      %v1862 = vpop.f32.mrb[0].mxu0
      %v1863 = vadd.f32 0.0, %v1862
      %v1864 = vpop.f32.mrb[0].mxu0
      %1865 = vmatprep.mubr.bf16.mxu0 0
      %1866 = vmatmul.mubr.bf16.gmra.mrb[0].mxu0 %v985
      %v1867 = vpop.f32.mrb[0].mxu0
      %v1868 = vadd.f32 0.0, %v1867
      %v1869 = vpop.f32.mrb[0].mxu0
      %v1870 = vpop.f32.mrb[0].mxu0
      %v1871 = vadd.f32 0.0, %v1870
      %v1872 = vpop.f32.mrb[0].mxu0
      %1873 = vmatprep.mubr.bf16.mxu0 0
      %1874 = vmatmul.mubr.bf16.gmra.mrb[0].mxu0 %v986
      %v1875 = vpop.f32.mrb[0].mxu0
      %v1876 = vadd.f32 0.0, %v1875
      %v1877 = vpop.f32.mrb[0].mxu0
      %v1878 = vpop.f32.mrb[0].mxu0
      %v1879 = vadd.f32 0.0, %v1878
      %v1880 = vpop.f32.mrb[0].mxu0
      %1881 = vmatprep.mubr.bf16.mxu0 0
      %1882 = vmatmul.mubr.bf16.gmra.mrb[0].mxu0 %v1775
      %v1883 = vpop.f32.mrb[0].mxu0
      %v1884 = vadd.f32 0.0, %v1883
      %v1885 = vpop.f32.mrb[0].mxu0
      %v1886 = vpop.f32.mrb[0].mxu0
      %v1887 = vadd.f32 0.0, %v1886
      %v1888 = vpop.f32.mrb[0].mxu0
      %1889 = vdwg.mxu0
      %v1890 = vadd.f32 %v1748, %v1860
      %v1891 = vadd.f32 %v1749, %v1863
      %v1892 = vadd.f32 %v1750, %v1868
      %v1893 = vadd.f32 %v1751, %v1871
      %v1894 = vadd.f32 %v1752, %v1876
      %v1895 = vadd.f32 %v1753, %v1879
      %v1896 = vadd.f32 %v1754, %v1884
      %v1897 = vadd.f32 %v1755, %v1887
      %v1898 = vunpack.c.h.b16 %v665
      %v1899 = vpack.c.b16 %v1774, %v1774
      %v1900 = vpack.c.b16 %v1898, %v1898
      %v1902 = vshrl.u32 %v1899, 16
      %v1904 = vrot.slane %v1902, 4
      %v1905 = vshll.u32 %v1899, 16
      %v1907 = vrot.slane %v1905, 5
      %v1908 = vor.u32 %v1904, %v1907
      %v1909 = vrot.slane %v1908, 4
      %v1911 = vshll.u32 %v1900, 16
      %v1913 = vrot.slane %v1911, 5
      %v1914 = vsel %vm724, %v1909, %v1913
      %s1915 = scalar_lea.vmem %s4, 448
      %v1916 = vld [vmem:[%s1915] sm:$0xf]
      %v1917 = vld [vmem:[%s1915 + $0x4] sm:$0xf]
      %v1918 = vld [vmem:[%s1915 + $0x8] sm:$0xf]
      %v1919 = vld [vmem:[%s1915 + $0xc] sm:$0xf]
      %v1920 = vld [vmem:[%s1915 + $0x10] sm:$0xf]
      %v1921 = vld [vmem:[%s1915 + $0x14] sm:$0xf]
      %v1922 = vld [vmem:[%s1915 + $0x18] sm:$0xf]
      %v1923 = vld [vmem:[%s1915 + $0x1c] sm:$0xf]
      %v1924 = vld [vmem:[%s1915 + $0x20] sm:$0xf]
      %v1925 = vld [vmem:[%s1915 + $0x24] sm:$0xf]
      %v1926 = vld [vmem:[%s1915 + $0x28] sm:$0xf]
      %v1927 = vld [vmem:[%s1915 + $0x2c] sm:$0xf]
      %v1928 = vld [vmem:[%s1915 + $0x30] sm:$0xf]
      %v1929 = vld [vmem:[%s1915 + $0x34] sm:$0xf]
      %v1930 = vld [vmem:[%s1915 + $0x38] sm:$0xf]
      %v1931 = vld [vmem:[%s1915 + $0x3c] sm:$0xf]
      %v1932 = vunpack.c.l.b16 %v1914
      %v1933 = vpack.c.b16 %v1932, %v1475
      %v1951 = vunpack.c.l.b16 %v1916
      %v1952 = vunpack.c.l.b16 %v1917
      %v1953 = vunpack.c.l.b16 %v1918
      %v1954 = vunpack.c.l.b16 %v1919
      %v1955 = vunpack.c.l.b16 %v1920
      %v1956 = vunpack.c.l.b16 %v1921
      %v1957 = vunpack.c.l.b16 %v1922
      %v1958 = vunpack.c.l.b16 %v1923
      %v1959 = vunpack.c.l.b16 %v1924
      %v1960 = vunpack.c.l.b16 %v1925
      %v1961 = vunpack.c.l.b16 %v1926
      %v1962 = vunpack.c.l.b16 %v1927
      %v1963 = vunpack.c.l.b16 %v1928
      %v1964 = vunpack.c.l.b16 %v1929
      %v1965 = vunpack.c.l.b16 %v1930
      %v1966 = vunpack.c.l.b16 %v1931
      %v1967 = vpack.c.b16 %v1952, %v1951
      %v1968 = vpack.c.b16 %v1954, %v1953
      %v1969 = vpack.c.b16 %v1956, %v1955
      %v1970 = vpack.c.b16 %v1958, %v1957
      %v1971 = vpack.c.b16 %v1960, %v1959
      %v1972 = vpack.c.b16 %v1962, %v1961
      %v1973 = vpack.c.b16 %v1964, %v1963
      %v1974 = vpack.c.b16 %v1966, %v1965
      %1983 = vmatprep.subr.bf16.mxu0 0
      %1984 = vmatpush1.bf16.msra.mxu0 %v1967
      %1985 = vmatprep.subr.bf16.mxu0 0
      %1986 = vmatpush1.bf16.msra.mxu0 %v1968
      %1987 = vmatprep.subr.bf16.mxu0 0
      %1988 = vmatpush1.bf16.msra.mxu0 %v1969
      %1989 = vmatprep.subr.bf16.mxu0 0
      %1990 = vmatpush1.bf16.msra.mxu0 %v1970
      %1991 = vmatprep.subr.bf16.mxu0 0
      %1992 = vmatpush1.bf16.msra.mxu0 %v1971
      %1993 = vmatprep.subr.bf16.mxu0 0
      %1994 = vmatpush1.bf16.msra.mxu0 %v1972
      %1995 = vmatprep.subr.bf16.mxu0 0
      %1996 = vmatpush1.bf16.msra.mxu0 %v1973
      %1997 = vmatprep.subr.bf16.mxu0 0
      %1998 = vmatpush1.bf16.msra.mxu0 %v1974
      %1999 = vmatprep.subr.bf16.mxu0 0
      %2000 = vmatpush1.bf16.msra.mxu0 0
      %2001 = vmatprep.subr.bf16.mxu0 0
      %2002 = vmatpush1.bf16.msra.mxu0 0
      %2003 = vmatprep.subr.bf16.mxu0 0
      %2004 = vmatpush1.bf16.msra.mxu0 0
      %2005 = vmatprep.subr.bf16.mxu0 0
      %2006 = vmatpush1.bf16.msra.mxu0 0
      %2007 = vmatprep.subr.bf16.mxu0 0
      %2008 = vmatpush1.bf16.msra.mxu0 0
      %2009 = vmatprep.subr.bf16.mxu0 0
      %2010 = vmatpush1.bf16.msra.mxu0 0
      %2011 = vmatprep.subr.bf16.mxu0 0
      %2012 = vmatpush1.bf16.msra.mxu0 0
      %2013 = vmatprep.subr.bf16.mxu0 0
      %2014 = vmatpush1.bf16.msra.mxu0 0
      %2015 = vmatprep.mubr.bf16.mxu0 0
      %2016 = vmatmul.mubr.bf16.gmra.mrb[0].mxu0 %v863
      %v2017 = vpop.f32.mrb[0].mxu0
      %v2018 = vadd.f32 0.0, %v2017
      %v2019 = vpop.f32.mrb[0].mxu0
      %v2020 = vpop.f32.mrb[0].mxu0
      %v2021 = vadd.f32 0.0, %v2020
      %v2022 = vpop.f32.mrb[0].mxu0
      %2023 = vmatprep.mubr.bf16.mxu0 0
      %2024 = vmatmul.mubr.bf16.gmra.mrb[0].mxu0 %v864
      %v2025 = vpop.f32.mrb[0].mxu0
      %v2026 = vadd.f32 0.0, %v2025
      %v2027 = vpop.f32.mrb[0].mxu0
      %v2028 = vpop.f32.mrb[0].mxu0
      %v2029 = vadd.f32 0.0, %v2028
      %v2030 = vpop.f32.mrb[0].mxu0
      %2031 = vmatprep.mubr.bf16.mxu0 0
      %2032 = vmatmul.mubr.bf16.gmra.mrb[0].mxu0 %v865
      %v2033 = vpop.f32.mrb[0].mxu0
      %v2034 = vadd.f32 0.0, %v2033
      %v2035 = vpop.f32.mrb[0].mxu0
      %v2036 = vpop.f32.mrb[0].mxu0
      %v2037 = vadd.f32 0.0, %v2036
      %v2038 = vpop.f32.mrb[0].mxu0
      %2039 = vmatprep.mubr.bf16.mxu0 0
      %2040 = vmatmul.mubr.bf16.gmra.mrb[0].mxu0 %v1933
      %v2041 = vpop.f32.mrb[0].mxu0
      %v2042 = vadd.f32 0.0, %v2041
      %v2043 = vpop.f32.mrb[0].mxu0
      %v2044 = vpop.f32.mrb[0].mxu0
      %v2045 = vadd.f32 0.0, %v2044
      %v2046 = vpop.f32.mrb[0].mxu0
      %2047 = vdwg.mxu0
      %v2048 = vadd.f32 %v1890, %v2018
      %v2049 = vadd.f32 %v1891, %v2021
      %v2050 = vadd.f32 %v1892, %v2026
      %v2051 = vadd.f32 %v1893, %v2029
      %v2052 = vadd.f32 %v1894, %v2034
      %v2053 = vadd.f32 %v1895, %v2037
      %v2054 = vadd.f32 %v1896, %v2042
      %v2055 = vadd.f32 %v1897, %v2045
      %v2056 = vrot.slane %v1899, 5
      %v2057 = vrot.slane %v2056, 4
      %v2058 = vrot.slane %v1900, 5
      %v2059 = vsel %vm1106, %v2057, %v2058
      %s2060 = scalar_lea.vmem %s4, 512
      %v2061 = vld [vmem:[%s2060] sm:$0xf]
      %v2062 = vld [vmem:[%s2060 + $0x4] sm:$0xf]
      %v2063 = vld [vmem:[%s2060 + $0x8] sm:$0xf]
      %v2064 = vld [vmem:[%s2060 + $0xc] sm:$0xf]
      %v2065 = vld [vmem:[%s2060 + $0x10] sm:$0xf]
      %v2066 = vld [vmem:[%s2060 + $0x14] sm:$0xf]
      %v2067 = vld [vmem:[%s2060 + $0x18] sm:$0xf]
      %v2068 = vld [vmem:[%s2060 + $0x1c] sm:$0xf]
      %v2069 = vld [vmem:[%s2060 + $0x20] sm:$0xf]
      %v2070 = vld [vmem:[%s2060 + $0x24] sm:$0xf]
      %v2071 = vld [vmem:[%s2060 + $0x28] sm:$0xf]
      %v2072 = vld [vmem:[%s2060 + $0x2c] sm:$0xf]
      %v2073 = vld [vmem:[%s2060 + $0x30] sm:$0xf]
      %v2074 = vld [vmem:[%s2060 + $0x34] sm:$0xf]
      %v2075 = vld [vmem:[%s2060 + $0x38] sm:$0xf]
      %v2076 = vld [vmem:[%s2060 + $0x3c] sm:$0xf]
      %v2077 = vunpack.c.l.b16 %v2059
      %v2078 = vpack.c.b16 %v2077, %v1626
      %v2096 = vunpack.c.l.b16 %v2061
      %v2097 = vunpack.c.l.b16 %v2062
      %v2098 = vunpack.c.l.b16 %v2063
      %v2099 = vunpack.c.l.b16 %v2064
      %v2100 = vunpack.c.l.b16 %v2065
      %v2101 = vunpack.c.l.b16 %v2066
      %v2102 = vunpack.c.l.b16 %v2067
      %v2103 = vunpack.c.l.b16 %v2068
      %v2104 = vunpack.c.l.b16 %v2069
      %v2105 = vunpack.c.l.b16 %v2070
      %v2106 = vunpack.c.l.b16 %v2071
      %v2107 = vunpack.c.l.b16 %v2072
      %v2108 = vunpack.c.l.b16 %v2073
      %v2109 = vunpack.c.l.b16 %v2074
      %v2110 = vunpack.c.l.b16 %v2075
      %v2111 = vunpack.c.l.b16 %v2076
      %v2112 = vpack.c.b16 %v2097, %v2096
      %v2113 = vpack.c.b16 %v2099, %v2098
      %v2114 = vpack.c.b16 %v2101, %v2100
      %v2115 = vpack.c.b16 %v2103, %v2102
      %v2116 = vpack.c.b16 %v2105, %v2104
      %v2117 = vpack.c.b16 %v2107, %v2106
      %v2118 = vpack.c.b16 %v2109, %v2108
      %v2119 = vpack.c.b16 %v2111, %v2110
      %2128 = vmatprep.subr.bf16.mxu0 0
      %2129 = vmatpush1.bf16.msra.mxu0 %v2112
      %2130 = vmatprep.subr.bf16.mxu0 0
      %2131 = vmatpush1.bf16.msra.mxu0 %v2113
      %2132 = vmatprep.subr.bf16.mxu0 0
      %2133 = vmatpush1.bf16.msra.mxu0 %v2114
      %2134 = vmatprep.subr.bf16.mxu0 0
      %2135 = vmatpush1.bf16.msra.mxu0 %v2115
      %2136 = vmatprep.subr.bf16.mxu0 0
      %2137 = vmatpush1.bf16.msra.mxu0 %v2116
      %2138 = vmatprep.subr.bf16.mxu0 0
      %2139 = vmatpush1.bf16.msra.mxu0 %v2117
      %2140 = vmatprep.subr.bf16.mxu0 0
      %2141 = vmatpush1.bf16.msra.mxu0 %v2118
      %2142 = vmatprep.subr.bf16.mxu0 0
      %2143 = vmatpush1.bf16.msra.mxu0 %v2119
      %2144 = vmatprep.subr.bf16.mxu0 0
      %2145 = vmatpush1.bf16.msra.mxu0 0
      %2146 = vmatprep.subr.bf16.mxu0 0
      %2147 = vmatpush1.bf16.msra.mxu0 0
      %2148 = vmatprep.subr.bf16.mxu0 0
      %2149 = vmatpush1.bf16.msra.mxu0 0
      %2150 = vmatprep.subr.bf16.mxu0 0
      %2151 = vmatpush1.bf16.msra.mxu0 0
      %2152 = vmatprep.subr.bf16.mxu0 0
      %2153 = vmatpush1.bf16.msra.mxu0 0
      %2154 = vmatprep.subr.bf16.mxu0 0
      %2155 = vmatpush1.bf16.msra.mxu0 0
      %2156 = vmatprep.subr.bf16.mxu0 0
      %2157 = vmatpush1.bf16.msra.mxu0 0
      %2158 = vmatprep.subr.bf16.mxu0 0
      %2159 = vmatpush1.bf16.msra.mxu0 0
      %2160 = vmatprep.mubr.bf16.mxu0 0
      %2161 = vmatmul.mubr.bf16.gmra.mrb[0].mxu0 %v1165
      %v2162 = vpop.f32.mrb[0].mxu0
      %v2163 = vadd.f32 0.0, %v2162
      %v2164 = vpop.f32.mrb[0].mxu0
      %v2165 = vpop.f32.mrb[0].mxu0
      %v2166 = vadd.f32 0.0, %v2165
      %v2167 = vpop.f32.mrb[0].mxu0
      %2168 = vmatprep.mubr.bf16.mxu0 0
      %2169 = vmatmul.mubr.bf16.gmra.mrb[0].mxu0 %v1166
      %v2170 = vpop.f32.mrb[0].mxu0
      %v2171 = vadd.f32 0.0, %v2170
      %v2172 = vpop.f32.mrb[0].mxu0
      %v2173 = vpop.f32.mrb[0].mxu0
      %v2174 = vadd.f32 0.0, %v2173
      %v2175 = vpop.f32.mrb[0].mxu0
      %2176 = vmatprep.mubr.bf16.mxu0 0
      %2177 = vmatmul.mubr.bf16.gmra.mrb[0].mxu0 %v1167
      %v2178 = vpop.f32.mrb[0].mxu0
      %v2179 = vadd.f32 0.0, %v2178
      %v2180 = vpop.f32.mrb[0].mxu0
      %v2181 = vpop.f32.mrb[0].mxu0
      %v2182 = vadd.f32 0.0, %v2181
      %v2183 = vpop.f32.mrb[0].mxu0
      %2184 = vmatprep.mubr.bf16.mxu0 0
      %2185 = vmatmul.mubr.bf16.gmra.mrb[0].mxu0 %v2078
      %v2186 = vpop.f32.mrb[0].mxu0
      %v2187 = vadd.f32 0.0, %v2186
      %v2188 = vpop.f32.mrb[0].mxu0
      %v2189 = vpop.f32.mrb[0].mxu0
      %v2190 = vadd.f32 0.0, %v2189
      %v2191 = vpop.f32.mrb[0].mxu0
      %2192 = vdwg.mxu0
      %v2193 = vadd.f32 %v2048, %v2163
      %v2194 = vadd.f32 %v2049, %v2166
      %v2195 = vadd.f32 %v2050, %v2171
      %v2196 = vadd.f32 %v2051, %v2174
      %v2197 = vadd.f32 %v2052, %v2179
      %v2198 = vadd.f32 %v2053, %v2182
      %v2199 = vadd.f32 %v2054, %v2187
      %v2200 = vadd.f32 %v2055, %v2190
      %v2201 = vld [vmem:[%s5] sm:$0x1]
      %v2203 = vlaneseq
      %v2204 = vshrl.u32 %v2203, 7
      %v2205 = vsub.s32 0, %v2204
      %v2206 = vrot.slane %v2201, %v2205
      %v2208 = vmul.f32 %v2193, %v2206
      %v2209 = vmul.f32 %v2194, %v2206
      %v2210 = vmul.f32 %v2195, %v2206
      %v2211 = vmul.f32 %v2196, %v2206
      %v2212 = vmul.f32 %v2197, %v2206
      %v2213 = vmul.f32 %v2198, %v2206
      %v2214 = vmul.f32 %v2199, %v2206
      %v2215 = vmul.f32 %v2200, %v2206
      %v2216 = vld [vmem:[%s6] sm:$0x1]
      %v2218 = vlaneseq
      %v2219 = vshrl.u32 %v2218, 7
      %v2220 = vsub.s32 0, %v2219
      %v2221 = vrot.slane %v2216, %v2220
      %v2223 = vadd.f32 %v2208, %v2221
      %v2224 = vadd.f32 %v2209, %v2221
      %v2225 = vadd.f32 %v2210, %v2221
      %v2226 = vadd.f32 %v2211, %v2221
      %v2227 = vadd.f32 %v2212, %v2221
      %v2228 = vadd.f32 %v2213, %v2221
      %v2229 = vadd.f32 %v2214, %v2221
      %v2230 = vadd.f32 %v2215, %v2221
      %v2231 = vld [vmem:[%s401] sm:$0xf]
      %v2232 = vld [vmem:[%s401 + $0x4] sm:$0xf]
      %v2233 = vld [vmem:[%s401 + $0x8] sm:$0xf]
      %v2234 = vld [vmem:[%s401 + $0xc] sm:$0xf]
      %v2235 = vld [vmem:[%s401 + $0x10] sm:$0xf]
      %v2236 = vld [vmem:[%s401 + $0x14] sm:$0xf]
      %v2237 = vld [vmem:[%s401 + $0x18] sm:$0xf]
      %v2238 = vld [vmem:[%s401 + $0x1c] sm:$0xf]
      %v2239 = vld [vmem:[%s8] sm:$0xf]
      %v2240 = vld [vmem:[%s8 + $0x4] sm:$0xf]
      %v2241 = vld [vmem:[%s8 + $0x8] sm:$0xf]
      %v2242 = vld [vmem:[%s8 + $0xc] sm:$0xf]
      %v2243 = vld [vmem:[%s8 + $0x10] sm:$0xf]
      %v2244 = vld [vmem:[%s8 + $0x14] sm:$0xf]
      %v2245 = vld [vmem:[%s8 + $0x18] sm:$0xf]
      %v2246 = vld [vmem:[%s8 + $0x1c] sm:$0xf]
      %v2247 = vld [vmem:[%s8 + $0x20] sm:$0xf]
      %v2248 = vld [vmem:[%s8 + $0x24] sm:$0xf]
      %v2249 = vld [vmem:[%s8 + $0x28] sm:$0xf]
      %v2250 = vld [vmem:[%s8 + $0x2c] sm:$0xf]
      %v2251 = vld [vmem:[%s8 + $0x30] sm:$0xf]
      %v2252 = vld [vmem:[%s8 + $0x34] sm:$0xf]
      %v2253 = vld [vmem:[%s8 + $0x38] sm:$0xf]
      %v2254 = vld [vmem:[%s8 + $0x3c] sm:$0xf]
      %v2263 = vunpack.c.l.b16 %v2231
      %v2264 = vunpack.c.l.b16 %v2232
      %v2265 = vunpack.c.l.b16 %v2233
      %v2266 = vunpack.c.l.b16 %v2234
      %v2267 = vunpack.c.l.b16 %v2235
      %v2268 = vunpack.c.l.b16 %v2236
      %v2269 = vunpack.c.l.b16 %v2237
      %v2270 = vunpack.c.l.b16 %v2238
      %v2271 = vpack.c.b16 %v2264, %v2263
      %v2272 = vpack.c.b16 %v2266, %v2265
      %v2273 = vpack.c.b16 %v2268, %v2267
      %v2274 = vpack.c.b16 %v2270, %v2269
      %v2295 = vunpack.c.l.b16 %v2239
      %v2296 = vunpack.c.l.b16 %v2240
      %v2297 = vunpack.c.l.b16 %v2241
      %v2298 = vunpack.c.l.b16 %v2242
      %v2299 = vunpack.c.l.b16 %v2243
      %v2300 = vunpack.c.l.b16 %v2244
      %v2301 = vunpack.c.l.b16 %v2245
      %v2302 = vunpack.c.l.b16 %v2246
      %v2303 = vunpack.c.l.b16 %v2247
      %v2304 = vunpack.c.l.b16 %v2248
      %v2305 = vunpack.c.l.b16 %v2249
      %v2306 = vunpack.c.l.b16 %v2250
      %v2307 = vunpack.c.l.b16 %v2251
      %v2308 = vunpack.c.l.b16 %v2252
      %v2309 = vunpack.c.l.b16 %v2253
      %v2310 = vunpack.c.l.b16 %v2254
      %v2311 = vpack.c.b16 %v2296, %v2295
      %v2312 = vpack.c.b16 %v2298, %v2297
      %v2313 = vpack.c.b16 %v2300, %v2299
      %v2314 = vpack.c.b16 %v2302, %v2301
      %v2315 = vpack.c.b16 %v2304, %v2303
      %v2316 = vpack.c.b16 %v2306, %v2305
      %v2317 = vpack.c.b16 %v2308, %v2307
      %v2318 = vpack.c.b16 %v2310, %v2309
      %2327 = vmatprep.subr.bf16.mxu0 0
      %2328 = vmatpush1.bf16.msra.mxu0 %v2311
      %2329 = vmatprep.subr.bf16.mxu0 0
      %2330 = vmatpush1.bf16.msra.mxu0 %v2312
      %2331 = vmatprep.subr.bf16.mxu0 0
      %2332 = vmatpush1.bf16.msra.mxu0 %v2313
      %2333 = vmatprep.subr.bf16.mxu0 0
      %2334 = vmatpush1.bf16.msra.mxu0 %v2314
      %2335 = vmatprep.subr.bf16.mxu0 0
      %2336 = vmatpush1.bf16.msra.mxu0 %v2315
      %2337 = vmatprep.subr.bf16.mxu0 0
      %2338 = vmatpush1.bf16.msra.mxu0 %v2316
      %2339 = vmatprep.subr.bf16.mxu0 0
      %2340 = vmatpush1.bf16.msra.mxu0 %v2317
      %2341 = vmatprep.subr.bf16.mxu0 0
      %2342 = vmatpush1.bf16.msra.mxu0 %v2318
      %2343 = vmatprep.subr.bf16.mxu0 0
      %2344 = vmatpush1.bf16.msra.mxu0 0
      %2345 = vmatprep.subr.bf16.mxu0 0
      %2346 = vmatpush1.bf16.msra.mxu0 0
      %2347 = vmatprep.subr.bf16.mxu0 0
      %2348 = vmatpush1.bf16.msra.mxu0 0
      %2349 = vmatprep.subr.bf16.mxu0 0
      %2350 = vmatpush1.bf16.msra.mxu0 0
      %2351 = vmatprep.subr.bf16.mxu0 0
      %2352 = vmatpush1.bf16.msra.mxu0 0
      %2353 = vmatprep.subr.bf16.mxu0 0
      %2354 = vmatpush1.bf16.msra.mxu0 0
      %2355 = vmatprep.subr.bf16.mxu0 0
      %2356 = vmatpush1.bf16.msra.mxu0 0
      %2357 = vmatprep.subr.bf16.mxu0 0
      %2358 = vmatpush1.bf16.msra.mxu0 0
      %2359 = vmatprep.mubr.bf16.mxu0 0
      %2360 = vmatmul.mubr.bf16.gmra.mrb[0].mxu0 %v2271
      %v2361 = vpop.f32.mrb[0].mxu0
      %v2362 = vadd.f32 0.0, %v2361
      %v2363 = vpop.f32.mrb[0].mxu0
      %v2364 = vpop.f32.mrb[0].mxu0
      %v2365 = vadd.f32 0.0, %v2364
      %v2366 = vpop.f32.mrb[0].mxu0
      %2367 = vmatprep.mubr.bf16.mxu0 0
      %2368 = vmatmul.mubr.bf16.gmra.mrb[0].mxu0 %v2272
      %v2369 = vpop.f32.mrb[0].mxu0
      %v2370 = vadd.f32 0.0, %v2369
      %v2371 = vpop.f32.mrb[0].mxu0
      %v2372 = vpop.f32.mrb[0].mxu0
      %v2373 = vadd.f32 0.0, %v2372
      %v2374 = vpop.f32.mrb[0].mxu0
      %2375 = vmatprep.mubr.bf16.mxu0 0
      %2376 = vmatmul.mubr.bf16.gmra.mrb[0].mxu0 %v2273
      %v2377 = vpop.f32.mrb[0].mxu0
      %v2378 = vadd.f32 0.0, %v2377
      %v2379 = vpop.f32.mrb[0].mxu0
      %v2380 = vpop.f32.mrb[0].mxu0
      %v2381 = vadd.f32 0.0, %v2380
      %v2382 = vpop.f32.mrb[0].mxu0
      %2383 = vmatprep.mubr.bf16.mxu0 0
      %2384 = vmatmul.mubr.bf16.gmra.mrb[0].mxu0 %v2274
      %v2385 = vpop.f32.mrb[0].mxu0
      %v2386 = vadd.f32 0.0, %v2385
      %v2387 = vpop.f32.mrb[0].mxu0
      %v2388 = vpop.f32.mrb[0].mxu0
      %v2389 = vadd.f32 0.0, %v2388
      %v2390 = vpop.f32.mrb[0].mxu0
      %2391 = vdwg.mxu0
      %v2392 = vld [vmem:[%s9] sm:$0x1]
      %v2394 = vlaneseq
      %v2395 = vshrl.u32 %v2394, 7
      %v2396 = vsub.s32 0, %v2395
      %v2397 = vrot.slane %v2392, %v2396
      %v2399 = vmul.f32 %v2362, %v2397
      %v2400 = vmul.f32 %v2365, %v2397
      %v2401 = vmul.f32 %v2370, %v2397
      %v2402 = vmul.f32 %v2373, %v2397
      %v2403 = vmul.f32 %v2378, %v2397
      %v2404 = vmul.f32 %v2381, %v2397
      %v2405 = vmul.f32 %v2386, %v2397
      %v2406 = vmul.f32 %v2389, %v2397
      %v2407 = vld [vmem:[%s10] sm:$0x1]
      %v2409 = vlaneseq
      %v2410 = vshrl.u32 %v2409, 7
      %v2411 = vsub.s32 0, %v2410
      %v2412 = vrot.slane %v2407, %v2411
      %v2414 = vadd.f32 %v2399, %v2412
      %v2415 = vadd.f32 %v2400, %v2412
      %v2416 = vadd.f32 %v2401, %v2412
      %v2417 = vadd.f32 %v2402, %v2412
      %v2418 = vadd.f32 %v2403, %v2412
      %v2419 = vadd.f32 %v2404, %v2412
      %v2420 = vadd.f32 %v2405, %v2412
      %v2421 = vadd.f32 %v2406, %v2412
      %v2422 = vadd.f32 %v2223, %v2414
      %v2423 = vadd.f32 %v2224, %v2415
      %v2424 = vadd.f32 %v2225, %v2416
      %v2425 = vadd.f32 %v2226, %v2417
      %v2426 = vadd.f32 %v2227, %v2418
      %v2427 = vadd.f32 %v2228, %v2419
      %v2428 = vadd.f32 %v2229, %v2420
      %v2429 = vadd.f32 %v2230, %v2421
      %v2430 = vmax.f32 %v2422, 0.0
      %v2431 = vmax.f32 %v2423, 0.0
      %v2432 = vmax.f32 %v2424, 0.0
      %v2433 = vmax.f32 %v2425, 0.0
      %v2434 = vmax.f32 %v2426, 0.0
      %v2435 = vmax.f32 %v2427, 0.0
      %v2436 = vmax.f32 %v2428, 0.0
      %v2437 = vmax.f32 %v2429, 0.0
      %2438 = vst [vmem:[%s406] sm:$0xff] %v2430
      %2439 = vst [vmem:[%s406 + $0x8] sm:$0xff] %v2431
      %2440 = vst [vmem:[%s406 + $0x10] sm:$0xff] %v2432
      %2441 = vst [vmem:[%s406 + $0x18] sm:$0xff] %v2433
      %2442 = vst [vmem:[%s406 + $0x20] sm:$0xff] %v2434
      %2443 = vst [vmem:[%s406 + $0x28] sm:$0xff] %v2435
      %2444 = vst [vmem:[%s406 + $0x30] sm:$0xff] %v2436
      %2445 = vst [vmem:[%s406 + $0x38] sm:$0xff] %v2437
      %p2446 = scmp.lt.s32.totalorder %s22, 1
      %s2447 = scalar_select %p2446, %s22, 1
      %s2448 = smul.addr %s2447, 8
      %s2449 = smul.addr %s2448, 8
      %s2450 = scalar_lea.vmem %s11, %s2449
      // Predicated region
      $region65: #{basic_block_forward.1} parent=63 // pred_check
        %p2451 = pneg %p281
      $region66: #{basic_block_forward.1} parent=63 // pred_check_branch
        %2453 = sbr.rel (%p2451) target = $region68
      $region67: #{basic_block_forward.1} parent=63 // pred_region
        _
      $region68: #{basic_block_forward.1} parent=63 // pred_fallthru
        _
    $region64: #{basic_block_forward.1} parent=5 // pred_fallthru
      _
    %p2454 = scmp.le.s32.totalorder 2, %s17
    // Predicated region
    $region69: #{basic_block_forward.1} parent=5 // pred_check
      %p2455 = pneg %p2454
    $region70: #{basic_block_forward.1} parent=5 // pred_check_branch
      %2457 = sbr.rel (%p2455) target = $region72
    $region71: #{basic_block_forward.1} parent=5 // pred_region
      %s2458 = ssub.s32 %s17, 2
      // Predicated region
      $region73: #{basic_block_forward.1} parent=71 // pred_check
        %p2459 = pneg %p287
      $region74: #{basic_block_forward.1} parent=71 // pred_check_branch
        %2461 = sbr.rel (%p2459) target = $region76
      $region75: #{basic_block_forward.1} parent=71 // pred_region
        %p2462 = scmp.lt.s32.totalorder %s23, 1
        %s2463 = scalar_select %p2462, %s23, 1
        %s2464 = smul.addr %s2463, 8
        %s2465 = smul.addr %s2464, 8
        %s2466 = scalar_lea.vmem %s11, %s2465
      $region76: #{basic_block_forward.1} parent=71 // pred_fallthru
        _
    $region72: #{basic_block_forward.1} parent=5 // pred_fallthru
      _
  $region6: #{basic_block_forward.1} parent=0 // loop_footer
    %s21 = sadd.s32 1, %s17
  $region7: #{basic_block_forward.1} parent=0 // loop_footer_branch
    %16 = sbr.rel target = $region3
  $region8: #{basic_block_forward.1} parent=0 // loop_exit
    _

</llo_original>
